<compile_context>
chip_gen: v7x
topology: tpu7x:2x2x1
jax: 0.10.0
libtpu: 0.0.40
codegen_flags: <defaults>
</compile_context>

<pallas_src>
import jax
import jax.numpy as jnp
from jax import lax
from jax.experimental import pallas as pl
from jax.experimental.pallas import tpu as pltpu

KH = KW = 5
PAD = 2
EPS = 1e-5
CMAX = 16            # every layer is computed as a 16 -> 16 conv (zero-padded channels)
NTAPS = KH * KW      # 25
NUM_BLOCKS = 5
NUM_LAYERS = NUM_BLOCKS * 4   # 20


def _make_fused_kernel(width, npix, num_layers):
    """Fused conv+BN+ReLU network kernel for static image width / pixel count."""

    def kernel(x_ref, mask_ref, w_ref, g_ref, b_ref, out_ref, slab_ref):
        # x_ref   : (CMAX, npix)            activation: channels on sublanes, n*h*w on lanes
        # mask_ref: (NTAPS, 1, npix)        per-tap validity mask ('same' zero padding)
        # w_ref   : (L, CMAX, NTAPS*CMAX)   per-layer im2col weight matrix (co x (tap,ci))
        # g_ref   : (L, CMAX, 1)            BN gamma (padded channels -> 1)
        # b_ref   : (L, CMAX, 1)            BN beta  (padded channels -> 0)
        # out_ref : (CMAX, npix)
        # slab_ref: (NTAPS*CMAX, npix)      im2col scratch, resident in VMEM
        inv_n = 1.0 / float(npix)

        def layer_body(l, x):
            # ---- im2col: slab[t*CMAX + ci, p] = x[ci, pixel shifted by tap t] (0 outside) ----
            for t in range(NTAPS):
                kh, kw = divmod(t, KW)
                s = (kh - PAD) * width + (kw - PAD)          # flat lane shift for this tap
                shifted = x if s == 0 else pltpu.roll(x, shift=(-s) % npix, axis=1)
                slab_ref[t * CMAX:(t + 1) * CMAX, :] = shifted * mask_ref[t]
            # ---- 5x5 'same' conv == one (CMAX, 400) @ (400, npix) MXU matmul ----
            y = jnp.dot(w_ref[l], slab_ref[...], preferred_element_type=jnp.float32)
            # ---- training-mode BatchNorm (biased variance, eps=1e-5) + affine + ReLU ----
            # (conv bias omitted: the batch-mean subtraction below cancels it exactly)
            mean = jnp.sum(y, axis=1, keepdims=True) * inv_n
            d = y - mean
            var = jnp.sum(d * d, axis=1, keepdims=True) * inv_n
            z = d * lax.rsqrt(var + EPS) * g_ref[l] + b_ref[l]
            return jnp.maximum(z, 0.0)

        out_ref[...] = lax.fori_loop(0, num_layers, layer_body, x_ref[...])

    return kernel


def _pack_conv_weight(w):
    """(KH, KW, cin, cout) -> (CMAX, NTAPS*CMAX) im2col matrix, zero-padded channels.

    Row co, column (kh*KW + kw)*CMAX + ci  ==  w[kh, kw, ci, co].
    """
    cin, cout = w.shape[2], w.shape[3]
    w = jnp.pad(w, ((0, 0), (0, 0), (0, CMAX - cin), (0, CMAX - cout)))
    return jnp.transpose(w, (3, 0, 1, 2)).reshape(CMAX, NTAPS * CMAX)


def _pack_bn_vec(v, fill):
    """(c,) -> (CMAX, 1), padding unused channels with `fill`."""
    return jnp.pad(v, (0, CMAX - v.shape[0]), constant_values=fill).reshape(CMAX, 1)


def _same_pad_masks(n, h, w):
    """(NTAPS, 1, n*h*w) f32 validity masks for each 5x5 tap under 'same' padding."""
    p = jnp.arange(n * h * w, dtype=jnp.int32)
    hh = (p // w) % h
    ww = p % w
    rows = []
    for kh in range(KH):
        for kw in range(KW):
            dh, dw = kh - PAD, kw - PAD
            ok = (hh + dh >= 0) & (hh + dh < h) & (ww + dw >= 0) & (ww + dw < w)
            rows.append(ok.astype(jnp.float32))
    return jnp.stack(rows).reshape(NTAPS, 1, n * h * w)


def convnet6e_forward(x_nchw, params_list):
    """ConvNet6e.forward. x_nchw: (N, 1, H, W) f32 -> (N, 1, H, W) f32."""
    n, cin, h, w = x_nchw.shape
    assert cin == 1, "ConvNet6e expects a single input channel"
    npix = n * h * w

    # Stack the 20 (conv, BN) layers; conv1/norm1 are reused (shared) exactly as in PyTorch.
    wmats, gammas, betas = [], [], []
    for p in params_list:
        block_layers = [
            (p['w0'], p['g1'], p['be1']),
            (p['w1'], p['g1'], p['be1']),
            (p['w1'], p['g1'], p['be1']),   # shared conv1 / norm1 applied again
            (p['w2'], p['g2'], p['be2']),
        ]
        for wt, g, b in block_layers:
            wmats.append(_pack_conv_weight(wt))
            gammas.append(_pack_bn_vec(g, 1.0))
            betas.append(_pack_bn_vec(b, 0.0))
    wstack = jnp.stack(wmats)      # (20, 16, 400)   ~512 KiB, VMEM resident
    gstack = jnp.stack(gammas)     # (20, 16, 1)
    bstack = jnp.stack(betas)      # (20, 16, 1)

    masks = _same_pad_masks(n, h, w)                                      # (25, 1, npix)
    # NCHW (C=1) -> channel-0 row of a lane-dense (16, N*H*W) activation slab.
    x_packed = jnp.pad(x_nchw.reshape(1, npix), ((0, CMAX - 1), (0, 0)))  # (16, npix)

    y = pl.pallas_call(
        _make_fused_kernel(w, npix, wstack.shape[0]),
        out_shape=jax.ShapeDtypeStruct((CMAX, npix), jnp.float32),
        in_specs=[pl.BlockSpec(memory_space=pltpu.MemorySpace.VMEM)] * 5,
        out_specs=pl.BlockSpec(memory_space=pltpu.MemorySpace.VMEM),
        scratch_shapes=[pltpu.VMEM((NTAPS * CMAX, npix), jnp.float32)],
    )(x_packed, masks, wstack, gstack, bstack)

    # Channel 0 is the real single-channel output; rows 1..15 are exactly zero.
    return y[0].reshape(n, 1, h, w)


def init_convnet_params(key):
    """Parameters for one ConvNet block (PyTorch-style uniform init).

    Conv biases are created to mirror the module's parameters but are never fed to the
    kernel: with training-mode BatchNorm right after each conv, subtracting the batch
    mean cancels any constant per-channel bias exactly.
    """
    ks = jax.random.split(key, 6)

    def conv_w(k, cin, cout):
        bound = 1.0 / (cin * KH * KW) ** 0.5
        return jax.random.uniform(k, (KH, KW, cin, cout), jnp.float32, -bound, bound)

    def conv_b(k, cin, cout):
        bound = 1.0 / (cin * KH * KW) ** 0.5
        return jax.random.uniform(k, (cout,), jnp.float32, -bound, bound)

    return dict(
        w0=conv_w(ks[0], 1, 16),  b0=conv_b(ks[1], 1, 16),
        w1=conv_w(ks[2], 16, 16), b1=conv_b(ks[3], 16, 16),
        w2=conv_w(ks[4], 16, 1),  b2=conv_b(ks[5], 16, 1),
        g1=jnp.ones((16,), jnp.float32), be1=jnp.zeros((16,), jnp.float32),
        g2=jnp.ones((1,), jnp.float32),  be2=jnp.zeros((1,), jnp.float32),
    )


if __name__ == "__main__":
    key = jax.random.PRNGKey(0)
    kx, kp = jax.random.split(key)

    x = jax.random.normal(kx, (2, 1, 16, 16), dtype=jnp.float32)   # NCHW, 1 input channel
    params_list = [init_convnet_params(k) for k in jax.random.split(kp, NUM_BLOCKS)]

    fwd = jax.jit(lambda inp: convnet6e_forward(inp, params_list))
    out = fwd(x)
    jax.block_until_ready(out)

    assert out.shape == (2, 1, 16, 16), out.shape
    assert bool(jnp.all(jnp.isfinite(out)))
    assert bool(jnp.all(out >= 0.0))   # final ReLU
    print("KERNEL_OK")
</pallas_src>

<mosaic_0001>
module attributes {stable_mosaic.version = 11 : i64} {
  func.func @kernel(%arg0: memref<16x512xf32, #tpu.memory_space<vmem>>, %arg1: memref<25x1x512xf32, #tpu.memory_space<vmem>>, %arg2: memref<20x16x400xf32, #tpu.memory_space<vmem>>, %arg3: memref<20x16x1xf32, #tpu.memory_space<vmem>>, %arg4: memref<20x16x1xf32, #tpu.memory_space<vmem>>, %arg5: memref<16x512xf32, #tpu.memory_space<vmem>>, %arg6: memref<400x512xf32, #tpu.memory_space<vmem>>) attributes {dimension_semantics = [], scalar_prefetch = 0 : i64, scratch_operands = 1 : i64, tpu.core_type = #tpu.core_type<tc>} {
    %c0 = arith.constant 0 : index
    %c0_0 = arith.constant 0 : index
    %0 = vector.load %arg0[%c0, %c0_0] : memref<16x512xf32, #tpu.memory_space<vmem>>, vector<16x512xf32>
    %c0_i32 = arith.constant 0 : i32
    %c20_i32 = arith.constant 20 : i32
    %1 = arith.addi %c0_i32, %c20_i32 : i32
    %c1_i32 = arith.constant 1 : i32
    %2 = scf.for %arg7 = %c0_i32 to %1 step %c1_i32 iter_args(%arg8 = %0) -> (vector<16x512xf32>)  : i32 {
      %c34_i32 = arith.constant 34 : i32
      %4 = tpu.dynamic_rotate %arg8 by %c34_i32 dim 1 : vector<16x512xf32>, i32 -> vector<16x512xf32>
      %c0_4 = arith.constant 0 : index
      %c0_5 = arith.constant 0 : index
      %c0_6 = arith.constant 0 : index
      %5 = vector.load %arg1[%c0_4, %c0_5, %c0_6] : memref<25x1x512xf32, #tpu.memory_space<vmem>>, vector<1x1x512xf32>
      %6 = vector.shape_cast %5 : vector<1x1x512xf32> to vector<1x512xf32>
      %7 = vector.broadcast %6 : vector<1x512xf32> to vector<16x512xf32>
      %8 = arith.mulf %4, %7 : vector<16x512xf32>
      %c0_7 = arith.constant 0 : index
      %c0_8 = arith.constant 0 : index
      %9 = vector.load %arg6[%c0_7, %c0_8] : memref<400x512xf32, #tpu.memory_space<vmem>>, vector<16x512xf32>
      tpu.vector_store %arg6[%c0_7, %c0_8], %8 {strides = array<i32>} : memref<400x512xf32, #tpu.memory_space<vmem>>, vector<16x512xf32>,
      %c33_i32 = arith.constant 33 : i32
      %10 = tpu.dynamic_rotate %arg8 by %c33_i32 dim 1 : vector<16x512xf32>, i32 -> vector<16x512xf32>
      %c1 = arith.constant 1 : index
      %c0_9 = arith.constant 0 : index
      %c0_10 = arith.constant 0 : index
      %11 = vector.load %arg1[%c1, %c0_9, %c0_10] : memref<25x1x512xf32, #tpu.memory_space<vmem>>, vector<1x1x512xf32>
      %12 = vector.shape_cast %11 : vector<1x1x512xf32> to vector<1x512xf32>
      %13 = vector.broadcast %12 : vector<1x512xf32> to vector<16x512xf32>
      %14 = arith.mulf %10, %13 : vector<16x512xf32>
      %c16 = arith.constant 16 : index
      %c0_11 = arith.constant 0 : index
      %15 = vector.load %arg6[%c16, %c0_11] : memref<400x512xf32, #tpu.memory_space<vmem>>, vector<16x512xf32>
      tpu.vector_store %arg6[%c16, %c0_11], %14 {strides = array<i32>} : memref<400x512xf32, #tpu.memory_space<vmem>>, vector<16x512xf32>,
      %c32_i32 = arith.constant 32 : i32
      %16 = tpu.dynamic_rotate %arg8 by %c32_i32 dim 1 : vector<16x512xf32>, i32 -> vector<16x512xf32>
      %c2 = arith.constant 2 : index
      %c0_12 = arith.constant 0 : index
      %c0_13 = arith.constant 0 : index
      %17 = vector.load %arg1[%c2, %c0_12, %c0_13] : memref<25x1x512xf32, #tpu.memory_space<vmem>>, vector<1x1x512xf32>
      %18 = vector.shape_cast %17 : vector<1x1x512xf32> to vector<1x512xf32>
      %19 = vector.broadcast %18 : vector<1x512xf32> to vector<16x512xf32>
      %20 = arith.mulf %16, %19 : vector<16x512xf32>
      %c32 = arith.constant 32 : index
      %c0_14 = arith.constant 0 : index
      %21 = vector.load %arg6[%c32, %c0_14] : memref<400x512xf32, #tpu.memory_space<vmem>>, vector<16x512xf32>
      tpu.vector_store %arg6[%c32, %c0_14], %20 {strides = array<i32>} : memref<400x512xf32, #tpu.memory_space<vmem>>, vector<16x512xf32>,
      %c31_i32 = arith.constant 31 : i32
      %22 = tpu.dynamic_rotate %arg8 by %c31_i32 dim 1 : vector<16x512xf32>, i32 -> vector<16x512xf32>
      %c3 = arith.constant 3 : index
      %c0_15 = arith.constant 0 : index
      %c0_16 = arith.constant 0 : index
      %23 = vector.load %arg1[%c3, %c0_15, %c0_16] : memref<25x1x512xf32, #tpu.memory_space<vmem>>, vector<1x1x512xf32>
      %24 = vector.shape_cast %23 : vector<1x1x512xf32> to vector<1x512xf32>
      %25 = vector.broadcast %24 : vector<1x512xf32> to vector<16x512xf32>
      %26 = arith.mulf %22, %25 : vector<16x512xf32>
      %c48 = arith.constant 48 : index
      %c0_17 = arith.constant 0 : index
      %27 = vector.load %arg6[%c48, %c0_17] : memref<400x512xf32, #tpu.memory_space<vmem>>, vector<16x512xf32>
      tpu.vector_store %arg6[%c48, %c0_17], %26 {strides = array<i32>} : memref<400x512xf32, #tpu.memory_space<vmem>>, vector<16x512xf32>,
      %c30_i32 = arith.constant 30 : i32
      %28 = tpu.dynamic_rotate %arg8 by %c30_i32 dim 1 : vector<16x512xf32>, i32 -> vector<16x512xf32>
      %c4 = arith.constant 4 : index
      %c0_18 = arith.constant 0 : index
      %c0_19 = arith.constant 0 : index
      %29 = vector.load %arg1[%c4, %c0_18, %c0_19] : memref<25x1x512xf32, #tpu.memory_space<vmem>>, vector<1x1x512xf32>
      %30 = vector.shape_cast %29 : vector<1x1x512xf32> to vector<1x512xf32>
      %31 = vector.broadcast %30 : vector<1x512xf32> to vector<16x512xf32>
      %32 = arith.mulf %28, %31 : vector<16x512xf32>
      %c64 = arith.constant 64 : index
      %c0_20 = arith.constant 0 : index
      %33 = vector.load %arg6[%c64, %c0_20] : memref<400x512xf32, #tpu.memory_space<vmem>>, vector<16x512xf32>
      tpu.vector_store %arg6[%c64, %c0_20], %32 {strides = array<i32>} : memref<400x512xf32, #tpu.memory_space<vmem>>, vector<16x512xf32>,
      %c18_i32 = arith.constant 18 : i32
      %34 = tpu.dynamic_rotate %arg8 by %c18_i32 dim 1 : vector<16x512xf32>, i32 -> vector<16x512xf32>
      %c5 = arith.constant 5 : index
      %c0_21 = arith.constant 0 : index
      %c0_22 = arith.constant 0 : index
      %35 = vector.load %arg1[%c5, %c0_21, %c0_22] : memref<25x1x512xf32, #tpu.memory_space<vmem>>, vector<1x1x512xf32>
      %36 = vector.shape_cast %35 : vector<1x1x512xf32> to vector<1x512xf32>
      %37 = vector.broadcast %36 : vector<1x512xf32> to vector<16x512xf32>
      %38 = arith.mulf %34, %37 : vector<16x512xf32>
      %c80 = arith.constant 80 : index
      %c0_23 = arith.constant 0 : index
      %39 = vector.load %arg6[%c80, %c0_23] : memref<400x512xf32, #tpu.memory_space<vmem>>, vector<16x512xf32>
      tpu.vector_store %arg6[%c80, %c0_23], %38 {strides = array<i32>} : memref<400x512xf32, #tpu.memory_space<vmem>>, vector<16x512xf32>,
      %c17_i32 = arith.constant 17 : i32
      %40 = tpu.dynamic_rotate %arg8 by %c17_i32 dim 1 : vector<16x512xf32>, i32 -> vector<16x512xf32>
      %c6 = arith.constant 6 : index
      %c0_24 = arith.constant 0 : index
      %c0_25 = arith.constant 0 : index
      %41 = vector.load %arg1[%c6, %c0_24, %c0_25] : memref<25x1x512xf32, #tpu.memory_space<vmem>>, vector<1x1x512xf32>
      %42 = vector.shape_cast %41 : vector<1x1x512xf32> to vector<1x512xf32>
      %43 = vector.broadcast %42 : vector<1x512xf32> to vector<16x512xf32>
      %44 = arith.mulf %40, %43 : vector<16x512xf32>
      %c96 = arith.constant 96 : index
      %c0_26 = arith.constant 0 : index
      %45 = vector.load %arg6[%c96, %c0_26] : memref<400x512xf32, #tpu.memory_space<vmem>>, vector<16x512xf32>
      tpu.vector_store %arg6[%c96, %c0_26], %44 {strides = array<i32>} : memref<400x512xf32, #tpu.memory_space<vmem>>, vector<16x512xf32>,
      %c16_i32 = arith.constant 16 : i32
      %46 = tpu.dynamic_rotate %arg8 by %c16_i32 dim 1 : vector<16x512xf32>, i32 -> vector<16x512xf32>
      %c7 = arith.constant 7 : index
      %c0_27 = arith.constant 0 : index
      %c0_28 = arith.constant 0 : index
      %47 = vector.load %arg1[%c7, %c0_27, %c0_28] : memref<25x1x512xf32, #tpu.memory_space<vmem>>, vector<1x1x512xf32>
      %48 = vector.shape_cast %47 : vector<1x1x512xf32> to vector<1x512xf32>
      %49 = vector.broadcast %48 : vector<1x512xf32> to vector<16x512xf32>
      %50 = arith.mulf %46, %49 : vector<16x512xf32>
      %c112 = arith.constant 112 : index
      %c0_29 = arith.constant 0 : index
      %51 = vector.load %arg6[%c112, %c0_29] : memref<400x512xf32, #tpu.memory_space<vmem>>, vector<16x512xf32>
      tpu.vector_store %arg6[%c112, %c0_29], %50 {strides = array<i32>} : memref<400x512xf32, #tpu.memory_space<vmem>>, vector<16x512xf32>,
      %c15_i32 = arith.constant 15 : i32
      %52 = tpu.dynamic_rotate %arg8 by %c15_i32 dim 1 : vector<16x512xf32>, i32 -> vector<16x512xf32>
      %c8 = arith.constant 8 : index
      %c0_30 = arith.constant 0 : index
      %c0_31 = arith.constant 0 : index
      %53 = vector.load %arg1[%c8, %c0_30, %c0_31] : memref<25x1x512xf32, #tpu.memory_space<vmem>>, vector<1x1x512xf32>
      %54 = vector.shape_cast %53 : vector<1x1x512xf32> to vector<1x512xf32>
      %55 = vector.broadcast %54 : vector<1x512xf32> to vector<16x512xf32>
      %56 = arith.mulf %52, %55 : vector<16x512xf32>
      %c128 = arith.constant 128 : index
      %c0_32 = arith.constant 0 : index
      %57 = vector.load %arg6[%c128, %c0_32] : memref<400x512xf32, #tpu.memory_space<vmem>>, vector<16x512xf32>
      tpu.vector_store %arg6[%c128, %c0_32], %56 {strides = array<i32>} : memref<400x512xf32, #tpu.memory_space<vmem>>, vector<16x512xf32>,
      %c14_i32 = arith.constant 14 : i32
      %58 = tpu.dynamic_rotate %arg8 by %c14_i32 dim 1 : vector<16x512xf32>, i32 -> vector<16x512xf32>
      %c9 = arith.constant 9 : index
      %c0_33 = arith.constant 0 : index
      %c0_34 = arith.constant 0 : index
      %59 = vector.load %arg1[%c9, %c0_33, %c0_34] : memref<25x1x512xf32, #tpu.memory_space<vmem>>, vector<1x1x512xf32>
      %60 = vector.shape_cast %59 : vector<1x1x512xf32> to vector<1x512xf32>
      %61 = vector.broadcast %60 : vector<1x512xf32> to vector<16x512xf32>
      %62 = arith.mulf %58, %61 : vector<16x512xf32>
      %c144 = arith.constant 144 : index
      %c0_35 = arith.constant 0 : index
      %63 = vector.load %arg6[%c144, %c0_35] : memref<400x512xf32, #tpu.memory_space<vmem>>, vector<16x512xf32>
      tpu.vector_store %arg6[%c144, %c0_35], %62 {strides = array<i32>} : memref<400x512xf32, #tpu.memory_space<vmem>>, vector<16x512xf32>,
      %c2_i32 = arith.constant 2 : i32
      %64 = tpu.dynamic_rotate %arg8 by %c2_i32 dim 1 : vector<16x512xf32>, i32 -> vector<16x512xf32>
      %c10 = arith.constant 10 : index
      %c0_36 = arith.constant 0 : index
      %c0_37 = arith.constant 0 : index
      %65 = vector.load %arg1[%c10, %c0_36, %c0_37] : memref<25x1x512xf32, #tpu.memory_space<vmem>>, vector<1x1x512xf32>
      %66 = vector.shape_cast %65 : vector<1x1x512xf32> to vector<1x512xf32>
      %67 = vector.broadcast %66 : vector<1x512xf32> to vector<16x512xf32>
      %68 = arith.mulf %64, %67 : vector<16x512xf32>
      %c160 = arith.constant 160 : index
      %c0_38 = arith.constant 0 : index
      %69 = vector.load %arg6[%c160, %c0_38] : memref<400x512xf32, #tpu.memory_space<vmem>>, vector<16x512xf32>
      tpu.vector_store %arg6[%c160, %c0_38], %68 {strides = array<i32>} : memref<400x512xf32, #tpu.memory_space<vmem>>, vector<16x512xf32>,
      %c1_i32_39 = arith.constant 1 : i32
      %70 = tpu.dynamic_rotate %arg8 by %c1_i32_39 dim 1 : vector<16x512xf32>, i32 -> vector<16x512xf32>
      %c11 = arith.constant 11 : index
      %c0_40 = arith.constant 0 : index
      %c0_41 = arith.constant 0 : index
      %71 = vector.load %arg1[%c11, %c0_40, %c0_41] : memref<25x1x512xf32, #tpu.memory_space<vmem>>, vector<1x1x512xf32>
      %72 = vector.shape_cast %71 : vector<1x1x512xf32> to vector<1x512xf32>
      %73 = vector.broadcast %72 : vector<1x512xf32> to vector<16x512xf32>
      %74 = arith.mulf %70, %73 : vector<16x512xf32>
      %c176 = arith.constant 176 : index
      %c0_42 = arith.constant 0 : index
      %75 = vector.load %arg6[%c176, %c0_42] : memref<400x512xf32, #tpu.memory_space<vmem>>, vector<16x512xf32>
      tpu.vector_store %arg6[%c176, %c0_42], %74 {strides = array<i32>} : memref<400x512xf32, #tpu.memory_space<vmem>>, vector<16x512xf32>,
      %c12 = arith.constant 12 : index
      %c0_43 = arith.constant 0 : index
      %c0_44 = arith.constant 0 : index
      %76 = vector.load %arg1[%c12, %c0_43, %c0_44] : memref<25x1x512xf32, #tpu.memory_space<vmem>>, vector<1x1x512xf32>
      %77 = vector.shape_cast %76 : vector<1x1x512xf32> to vector<1x512xf32>
      %78 = vector.broadcast %77 : vector<1x512xf32> to vector<16x512xf32>
      %79 = arith.mulf %arg8, %78 : vector<16x512xf32>
      %c192 = arith.constant 192 : index
      %c0_45 = arith.constant 0 : index
      %80 = vector.load %arg6[%c192, %c0_45] : memref<400x512xf32, #tpu.memory_space<vmem>>, vector<16x512xf32>
      tpu.vector_store %arg6[%c192, %c0_45], %79 {strides = array<i32>} : memref<400x512xf32, #tpu.memory_space<vmem>>, vector<16x512xf32>,
      %c511_i32 = arith.constant 511 : i32
      %81 = tpu.dynamic_rotate %arg8 by %c511_i32 dim 1 : vector<16x512xf32>, i32 -> vector<16x512xf32>
      %c13 = arith.constant 13 : index
      %c0_46 = arith.constant 0 : index
      %c0_47 = arith.constant 0 : index
      %82 = vector.load %arg1[%c13, %c0_46, %c0_47] : memref<25x1x512xf32, #tpu.memory_space<vmem>>, vector<1x1x512xf32>
      %83 = vector.shape_cast %82 : vector<1x1x512xf32> to vector<1x512xf32>
      %84 = vector.broadcast %83 : vector<1x512xf32> to vector<16x512xf32>
      %85 = arith.mulf %81, %84 : vector<16x512xf32>
      %c208 = arith.constant 208 : index
      %c0_48 = arith.constant 0 : index
      %86 = vector.load %arg6[%c208, %c0_48] : memref<400x512xf32, #tpu.memory_space<vmem>>, vector<16x512xf32>
      tpu.vector_store %arg6[%c208, %c0_48], %85 {strides = array<i32>} : memref<400x512xf32, #tpu.memory_space<vmem>>, vector<16x512xf32>,
      %c510_i32 = arith.constant 510 : i32
      %87 = tpu.dynamic_rotate %arg8 by %c510_i32 dim 1 : vector<16x512xf32>, i32 -> vector<16x512xf32>
      %c14 = arith.constant 14 : index
      %c0_49 = arith.constant 0 : index
      %c0_50 = arith.constant 0 : index
      %88 = vector.load %arg1[%c14, %c0_49, %c0_50] : memref<25x1x512xf32, #tpu.memory_space<vmem>>, vector<1x1x512xf32>
      %89 = vector.shape_cast %88 : vector<1x1x512xf32> to vector<1x512xf32>
      %90 = vector.broadcast %89 : vector<1x512xf32> to vector<16x512xf32>
      %91 = arith.mulf %87, %90 : vector<16x512xf32>
      %c224 = arith.constant 224 : index
      %c0_51 = arith.constant 0 : index
      %92 = vector.load %arg6[%c224, %c0_51] : memref<400x512xf32, #tpu.memory_space<vmem>>, vector<16x512xf32>
      tpu.vector_store %arg6[%c224, %c0_51], %91 {strides = array<i32>} : memref<400x512xf32, #tpu.memory_space<vmem>>, vector<16x512xf32>,
      %c498_i32 = arith.constant 498 : i32
      %93 = tpu.dynamic_rotate %arg8 by %c498_i32 dim 1 : vector<16x512xf32>, i32 -> vector<16x512xf32>
      %c15 = arith.constant 15 : index
      %c0_52 = arith.constant 0 : index
      %c0_53 = arith.constant 0 : index
      %94 = vector.load %arg1[%c15, %c0_52, %c0_53] : memref<25x1x512xf32, #tpu.memory_space<vmem>>, vector<1x1x512xf32>
      %95 = vector.shape_cast %94 : vector<1x1x512xf32> to vector<1x512xf32>
      %96 = vector.broadcast %95 : vector<1x512xf32> to vector<16x512xf32>
      %97 = arith.mulf %93, %96 : vector<16x512xf32>
      %c240 = arith.constant 240 : index
      %c0_54 = arith.constant 0 : index
      %98 = vector.load %arg6[%c240, %c0_54] : memref<400x512xf32, #tpu.memory_space<vmem>>, vector<16x512xf32>
      tpu.vector_store %arg6[%c240, %c0_54], %97 {strides = array<i32>} : memref<400x512xf32, #tpu.memory_space<vmem>>, vector<16x512xf32>,
      %c497_i32 = arith.constant 497 : i32
      %99 = tpu.dynamic_rotate %arg8 by %c497_i32 dim 1 : vector<16x512xf32>, i32 -> vector<16x512xf32>
      %c16_55 = arith.constant 16 : index
      %c0_56 = arith.constant 0 : index
      %c0_57 = arith.constant 0 : index
      %100 = vector.load %arg1[%c16_55, %c0_56, %c0_57] : memref<25x1x512xf32, #tpu.memory_space<vmem>>, vector<1x1x512xf32>
      %101 = vector.shape_cast %100 : vector<1x1x512xf32> to vector<1x512xf32>
      %102 = vector.broadcast %101 : vector<1x512xf32> to vector<16x512xf32>
      %103 = arith.mulf %99, %102 : vector<16x512xf32>
      %c256 = arith.constant 256 : index
      %c0_58 = arith.constant 0 : index
      %104 = vector.load %arg6[%c256, %c0_58] : memref<400x512xf32, #tpu.memory_space<vmem>>, vector<16x512xf32>
      tpu.vector_store %arg6[%c256, %c0_58], %103 {strides = array<i32>} : memref<400x512xf32, #tpu.memory_space<vmem>>, vector<16x512xf32>,
      %c496_i32 = arith.constant 496 : i32
      %105 = tpu.dynamic_rotate %arg8 by %c496_i32 dim 1 : vector<16x512xf32>, i32 -> vector<16x512xf32>
      %c17 = arith.constant 17 : index
      %c0_59 = arith.constant 0 : index
      %c0_60 = arith.constant 0 : index
      %106 = vector.load %arg1[%c17, %c0_59, %c0_60] : memref<25x1x512xf32, #tpu.memory_space<vmem>>, vector<1x1x512xf32>
      %107 = vector.shape_cast %106 : vector<1x1x512xf32> to vector<1x512xf32>
      %108 = vector.broadcast %107 : vector<1x512xf32> to vector<16x512xf32>
      %109 = arith.mulf %105, %108 : vector<16x512xf32>
      %c272 = arith.constant 272 : index
      %c0_61 = arith.constant 0 : index
      %110 = vector.load %arg6[%c272, %c0_61] : memref<400x512xf32, #tpu.memory_space<vmem>>, vector<16x512xf32>
      tpu.vector_store %arg6[%c272, %c0_61], %109 {strides = array<i32>} : memref<400x512xf32, #tpu.memory_space<vmem>>, vector<16x512xf32>,
      %c495_i32 = arith.constant 495 : i32
      %111 = tpu.dynamic_rotate %arg8 by %c495_i32 dim 1 : vector<16x512xf32>, i32 -> vector<16x512xf32>
      %c18 = arith.constant 18 : index
      %c0_62 = arith.constant 0 : index
      %c0_63 = arith.constant 0 : index
      %112 = vector.load %arg1[%c18, %c0_62, %c0_63] : memref<25x1x512xf32, #tpu.memory_space<vmem>>, vector<1x1x512xf32>
      %113 = vector.shape_cast %112 : vector<1x1x512xf32> to vector<1x512xf32>
      %114 = vector.broadcast %113 : vector<1x512xf32> to vector<16x512xf32>
      %115 = arith.mulf %111, %114 : vector<16x512xf32>
      %c288 = arith.constant 288 : index
      %c0_64 = arith.constant 0 : index
      %116 = vector.load %arg6[%c288, %c0_64] : memref<400x512xf32, #tpu.memory_space<vmem>>, vector<16x512xf32>
      tpu.vector_store %arg6[%c288, %c0_64], %115 {strides = array<i32>} : memref<400x512xf32, #tpu.memory_space<vmem>>, vector<16x512xf32>,
      %c494_i32 = arith.constant 494 : i32
      %117 = tpu.dynamic_rotate %arg8 by %c494_i32 dim 1 : vector<16x512xf32>, i32 -> vector<16x512xf32>
      %c19 = arith.constant 19 : index
      %c0_65 = arith.constant 0 : index
      %c0_66 = arith.constant 0 : index
      %118 = vector.load %arg1[%c19, %c0_65, %c0_66] : memref<25x1x512xf32, #tpu.memory_space<vmem>>, vector<1x1x512xf32>
      %119 = vector.shape_cast %118 : vector<1x1x512xf32> to vector<1x512xf32>
      %120 = vector.broadcast %119 : vector<1x512xf32> to vector<16x512xf32>
      %121 = arith.mulf %117, %120 : vector<16x512xf32>
      %c304 = arith.constant 304 : index
      %c0_67 = arith.constant 0 : index
      %122 = vector.load %arg6[%c304, %c0_67] : memref<400x512xf32, #tpu.memory_space<vmem>>, vector<16x512xf32>
      tpu.vector_store %arg6[%c304, %c0_67], %121 {strides = array<i32>} : memref<400x512xf32, #tpu.memory_space<vmem>>, vector<16x512xf32>,
      %c482_i32 = arith.constant 482 : i32
      %123 = tpu.dynamic_rotate %arg8 by %c482_i32 dim 1 : vector<16x512xf32>, i32 -> vector<16x512xf32>
      %c20 = arith.constant 20 : index
      %c0_68 = arith.constant 0 : index
      %c0_69 = arith.constant 0 : index
      %124 = vector.load %arg1[%c20, %c0_68, %c0_69] : memref<25x1x512xf32, #tpu.memory_space<vmem>>, vector<1x1x512xf32>
      %125 = vector.shape_cast %124 : vector<1x1x512xf32> to vector<1x512xf32>
      %126 = vector.broadcast %125 : vector<1x512xf32> to vector<16x512xf32>
      %127 = arith.mulf %123, %126 : vector<16x512xf32>
      %c320 = arith.constant 320 : index
      %c0_70 = arith.constant 0 : index
      %128 = vector.load %arg6[%c320, %c0_70] : memref<400x512xf32, #tpu.memory_space<vmem>>, vector<16x512xf32>
      tpu.vector_store %arg6[%c320, %c0_70], %127 {strides = array<i32>} : memref<400x512xf32, #tpu.memory_space<vmem>>, vector<16x512xf32>,
      %c481_i32 = arith.constant 481 : i32
      %129 = tpu.dynamic_rotate %arg8 by %c481_i32 dim 1 : vector<16x512xf32>, i32 -> vector<16x512xf32>
      %c21 = arith.constant 21 : index
      %c0_71 = arith.constant 0 : index
      %c0_72 = arith.constant 0 : index
      %130 = vector.load %arg1[%c21, %c0_71, %c0_72] : memref<25x1x512xf32, #tpu.memory_space<vmem>>, vector<1x1x512xf32>
      %131 = vector.shape_cast %130 : vector<1x1x512xf32> to vector<1x512xf32>
      %132 = vector.broadcast %131 : vector<1x512xf32> to vector<16x512xf32>
      %133 = arith.mulf %129, %132 : vector<16x512xf32>
      %c336 = arith.constant 336 : index
      %c0_73 = arith.constant 0 : index
      %134 = vector.load %arg6[%c336, %c0_73] : memref<400x512xf32, #tpu.memory_space<vmem>>, vector<16x512xf32>
      tpu.vector_store %arg6[%c336, %c0_73], %133 {strides = array<i32>} : memref<400x512xf32, #tpu.memory_space<vmem>>, vector<16x512xf32>,
      %c480_i32 = arith.constant 480 : i32
      %135 = tpu.dynamic_rotate %arg8 by %c480_i32 dim 1 : vector<16x512xf32>, i32 -> vector<16x512xf32>
      %c22 = arith.constant 22 : index
      %c0_74 = arith.constant 0 : index
      %c0_75 = arith.constant 0 : index
      %136 = vector.load %arg1[%c22, %c0_74, %c0_75] : memref<25x1x512xf32, #tpu.memory_space<vmem>>, vector<1x1x512xf32>
      %137 = vector.shape_cast %136 : vector<1x1x512xf32> to vector<1x512xf32>
      %138 = vector.broadcast %137 : vector<1x512xf32> to vector<16x512xf32>
      %139 = arith.mulf %135, %138 : vector<16x512xf32>
      %c352 = arith.constant 352 : index
      %c0_76 = arith.constant 0 : index
      %140 = vector.load %arg6[%c352, %c0_76] : memref<400x512xf32, #tpu.memory_space<vmem>>, vector<16x512xf32>
      tpu.vector_store %arg6[%c352, %c0_76], %139 {strides = array<i32>} : memref<400x512xf32, #tpu.memory_space<vmem>>, vector<16x512xf32>,
      %c479_i32 = arith.constant 479 : i32
      %141 = tpu.dynamic_rotate %arg8 by %c479_i32 dim 1 : vector<16x512xf32>, i32 -> vector<16x512xf32>
      %c23 = arith.constant 23 : index
      %c0_77 = arith.constant 0 : index
      %c0_78 = arith.constant 0 : index
      %142 = vector.load %arg1[%c23, %c0_77, %c0_78] : memref<25x1x512xf32, #tpu.memory_space<vmem>>, vector<1x1x512xf32>
      %143 = vector.shape_cast %142 : vector<1x1x512xf32> to vector<1x512xf32>
      %144 = vector.broadcast %143 : vector<1x512xf32> to vector<16x512xf32>
      %145 = arith.mulf %141, %144 : vector<16x512xf32>
      %c368 = arith.constant 368 : index
      %c0_79 = arith.constant 0 : index
      %146 = vector.load %arg6[%c368, %c0_79] : memref<400x512xf32, #tpu.memory_space<vmem>>, vector<16x512xf32>
      tpu.vector_store %arg6[%c368, %c0_79], %145 {strides = array<i32>} : memref<400x512xf32, #tpu.memory_space<vmem>>, vector<16x512xf32>,
      %c478_i32 = arith.constant 478 : i32
      %147 = tpu.dynamic_rotate %arg8 by %c478_i32 dim 1 : vector<16x512xf32>, i32 -> vector<16x512xf32>
      %c24 = arith.constant 24 : index
      %c0_80 = arith.constant 0 : index
      %c0_81 = arith.constant 0 : index
      %148 = vector.load %arg1[%c24, %c0_80, %c0_81] : memref<25x1x512xf32, #tpu.memory_space<vmem>>, vector<1x1x512xf32>
      %149 = vector.shape_cast %148 : vector<1x1x512xf32> to vector<1x512xf32>
      %150 = vector.broadcast %149 : vector<1x512xf32> to vector<16x512xf32>
      %151 = arith.mulf %147, %150 : vector<16x512xf32>
      %c384 = arith.constant 384 : index
      %c0_82 = arith.constant 0 : index
      %152 = vector.load %arg6[%c384, %c0_82] : memref<400x512xf32, #tpu.memory_space<vmem>>, vector<16x512xf32>
      tpu.vector_store %arg6[%c384, %c0_82], %151 {strides = array<i32>} : memref<400x512xf32, #tpu.memory_space<vmem>>, vector<16x512xf32>,
      %153 = arith.index_cast %arg7 : i32 to index
      %c0_83 = arith.constant 0 : index
      %c0_84 = arith.constant 0 : index
      %154 = vector.load %arg2[%153, %c0_83, %c0_84] : memref<20x16x400xf32, #tpu.memory_space<vmem>>, vector<1x16x400xf32>
      %155 = vector.shape_cast %154 : vector<1x16x400xf32> to vector<16x400xf32>
      %c0_85 = arith.constant 0 : index
      %c0_86 = arith.constant 0 : index
      %156 = vector.load %arg6[%c0_85, %c0_86] : memref<400x512xf32, #tpu.memory_space<vmem>>, vector<400x512xf32>
      %cst = arith.constant dense<0.000000e+00> : vector<16x512xf32>
      %157 = tpu.matmul %155, %156, %cst {dimension_numbers = #tpu.dot_dimension_numbers<[1], [0], [0], [1], [0, 0, 1, 1], [], []>} : vector<16x400xf32>, vector<400x512xf32>, vector<16x512xf32> -> vector<16x512xf32>
      %cst_87 = arith.constant dense<0.000000e+00> : vector<16xf32>
      %158 = vector.multi_reduction <add>, %157, %cst_87 [1] : vector<16x512xf32> to vector<16xf32>
      %159 = vector.shape_cast %158 : vector<16xf32> to vector<16x1xf32>
      %cst_88 = arith.constant 0.001953125 : f32
      %160 = vector.broadcast %cst_88 : f32 to vector<16x1xf32>
      %161 = arith.mulf %159, %160 : vector<16x1xf32>
      %162 = vector.broadcast %161 : vector<16x1xf32> to vector<16x512xf32>
      %163 = arith.subf %157, %162 : vector<16x512xf32>
      %164 = arith.mulf %163, %163 : vector<16x512xf32>
      %cst_89 = arith.constant dense<0.000000e+00> : vector<16xf32>
      %165 = vector.multi_reduction <add>, %164, %cst_89 [1] : vector<16x512xf32> to vector<16xf32>
      %166 = vector.shape_cast %165 : vector<16xf32> to vector<16x1xf32>
      %cst_90 = arith.constant 0.001953125 : f32
      %167 = vector.broadcast %cst_90 : f32 to vector<16x1xf32>
      %168 = arith.mulf %166, %167 : vector<16x1xf32>
      %cst_91 = arith.constant 9.99999974E-6 : f32
      %169 = vector.broadcast %cst_91 : f32 to vector<16x1xf32>
      %170 = arith.addf %168, %169 : vector<16x1xf32>
      %171 = math.rsqrt %170 : vector<16x1xf32>
      %172 = vector.broadcast %171 : vector<16x1xf32> to vector<16x512xf32>
      %173 = arith.mulf %163, %172 : vector<16x512xf32>
      %174 = arith.index_cast %arg7 : i32 to index
      %c0_92 = arith.constant 0 : index
      %c0_93 = arith.constant 0 : index
      %175 = vector.load %arg3[%174, %c0_92, %c0_93] : memref<20x16x1xf32, #tpu.memory_space<vmem>>, vector<1x16x1xf32>
      %176 = vector.shape_cast %175 : vector<1x16x1xf32> to vector<16x1xf32>
      %177 = vector.broadcast %176 : vector<16x1xf32> to vector<16x512xf32>
      %178 = arith.mulf %173, %177 : vector<16x512xf32>
      %179 = arith.index_cast %arg7 : i32 to index
      %c0_94 = arith.constant 0 : index
      %c0_95 = arith.constant 0 : index
      %180 = vector.load %arg4[%179, %c0_94, %c0_95] : memref<20x16x1xf32, #tpu.memory_space<vmem>>, vector<1x16x1xf32>
      %181 = vector.shape_cast %180 : vector<1x16x1xf32> to vector<16x1xf32>
      %182 = vector.broadcast %181 : vector<16x1xf32> to vector<16x512xf32>
      %183 = arith.addf %178, %182 : vector<16x512xf32>
      %cst_96 = arith.constant 0.000000e+00 : f32
      %184 = vector.broadcast %cst_96 : f32 to vector<16x512xf32>
      %185 = arith.maximumf %183, %184 : vector<16x512xf32>
      scf.yield %185 : vector<16x512xf32>
    }
    %c20_i32_1 = arith.constant 20 : i32
    %c0_2 = arith.constant 0 : index
    %c0_3 = arith.constant 0 : index
    %3 = vector.load %arg5[%c0_2, %c0_3] : memref<16x512xf32, #tpu.memory_space<vmem>>, vector<16x512xf32>
    tpu.vector_store %arg5[%c0_2, %c0_3], %2 {strides = array<i32>} : memref<16x512xf32, #tpu.memory_space<vmem>>, vector<16x512xf32>,
    return
  }
}

</mosaic_0001>

<llo_original>
// kernel: squeeze.1
$region0: #{squeeze.1}
  %s0 = inlined_call_operand.vmem [shape: f32[512], index: 0, kind: input, shape index: {}]
  %s1 = inlined_call_operand.hbm [shape: f32[2,1,16,16], index: 1, kind: output, shape index: {}]
  $region1: #{squeeze.1} parent=0
    #allocation0 [shape = 'u8[16384]{0}', space=vmem, size = 0x4000, scoped, tag = 'operand span for operand 1']
    #allocation1 [shape = 's32[1]{0}', space=sflag, size = 0x4, scoped, tag = 'scoped memory for squeeze.1']
    #allocation2 [shape = 'u8[4096]{0}', space=vmem, size = 0x1000, scoped, tag = 'scoped mem for input reshape']
    %2 = vsyncpa [#allocation1], 0
    %s4 = sshllo.u32 0, 4
    %v5 = vld [vmem:[%s0] sm:%s4]
    %6 = vst [vmem:[#allocation2] sm:%s4] %v5
    %v7 = vld [vmem:[#allocation2] sm:$0xf]
    %vm8 = vcmask 130048
    %9 = vst.msk [vmem:[#allocation0] ss:$8 sm:$0xf] %vm8, %v7
    %v10 = vld [vmem:[#allocation2] sm:$0xf]
    %11 = vrot.lane.b32.xlu0 %v10, 112
    %v12 = vpop.permute.xlu0 %11
    %vm13 = vcmask 130048
    %s14 = scalar_lea.vmem [#allocation0], 1
    %15 = vst.msk [vmem:[%s14] ss:$8 sm:$0xf] %vm13, %v12
    %v16 = vld [vmem:[#allocation2] sm:$0xf]
    %17 = vrot.lane.b32.xlu0 %v16, 96
    %v18 = vpop.permute.xlu0 %17
    %vm19 = vcmask 130048
    %s20 = scalar_lea.vmem [#allocation0], 2
    %21 = vst.msk [vmem:[%s20] ss:$8 sm:$0xf] %vm19, %v18
    %v22 = vld [vmem:[#allocation2] sm:$0xf]
    %23 = vrot.lane.b32.xlu0 %v22, 80
    %v24 = vpop.permute.xlu0 %23
    %vm25 = vcmask 130048
    %s26 = scalar_lea.vmem [#allocation0], 3
    %27 = vst.msk [vmem:[%s26] ss:$8 sm:$0xf] %vm25, %v24
    %v28 = vld [vmem:[#allocation2] sm:$0xf]
    %29 = vrot.lane.b32.xlu0 %v28, 64
    %v30 = vpop.permute.xlu0 %29
    %vm31 = vcmask 130048
    %s32 = scalar_lea.vmem [#allocation0], 4
    %33 = vst.msk [vmem:[%s32] ss:$8 sm:$0xf] %vm31, %v30
    %v34 = vld [vmem:[#allocation2] sm:$0xf]
    %35 = vrot.lane.b32.xlu0 %v34, 48
    %v36 = vpop.permute.xlu0 %35
    %vm37 = vcmask 130048
    %s38 = scalar_lea.vmem [#allocation0], 5
    %39 = vst.msk [vmem:[%s38] ss:$8 sm:$0xf] %vm37, %v36
    %v40 = vld [vmem:[#allocation2] sm:$0xf]
    %41 = vrot.lane.b32.xlu0 %v40, 32
    %v42 = vpop.permute.xlu0 %41
    %vm43 = vcmask 130048
    %s44 = scalar_lea.vmem [#allocation0], 6
    %45 = vst.msk [vmem:[%s44] ss:$8 sm:$0xf] %vm43, %v42
    %v46 = vld [vmem:[#allocation2] sm:$0xf]
    %47 = vrot.lane.b32.xlu0 %v46, 16
    %v48 = vpop.permute.xlu0 %47
    %vm49 = vcmask 130048
    %s50 = scalar_lea.vmem [#allocation0], 7
    %51 = vst.msk [vmem:[%s50] ss:$8 sm:$0xf] %vm49, %v48
    %s53 = ssub.s32 512, 512
    %54 = vsyncadd [#allocation1], %s53
    %s56 = sshll.u32 [#allocation0], 4
    %s57 = int_to_ptr.vmem [resolvable:$true] %s56
    %59 = dma.vmem_to_hbm [thread:$0]  %s57, 512, %s1, [#allocation1]
    %60 = dma.done [#allocation1], 512
    %61 = vsyncpa [#allocation1], 1

// kernel: _lambda_.1
$region0: #{_lambda_.1}
  #allocation0 [shape = 'u32[]', space=smem, size = 0x4, offset = 0x4, fixed_abs, tag = 'smem constant byte address 0x4 - core index']
  #allocation1 [shape = 'u32[144,128]{1,0:T(1,128)}', space=vmem, size = 0x12000, scoped, tag = 'internal scratch']
  #allocation2 [shape = 'f32[400,512]{1,0:T(8,128)}', space=vmem, size = 0xc8000, scoped, tag = 'scratch operand']
  %s0 = inlined_call_operand.vmem [shape: f32[16,512], index: 0, kind: input, shape index: {}]
  %s1 = inlined_call_operand.vmem [shape: f32[25,1,512], index: 1, kind: input, shape index: {}]
  %s2 = inlined_call_operand.vmem [shape: f32[20,16,400], index: 2, kind: input, shape index: {}]
  %s3 = inlined_call_operand.vmem [shape: f32[20,16,1], index: 3, kind: input, shape index: {}]
  %s4 = inlined_call_operand.vmem [shape: f32[20,16,1], index: 4, kind: input, shape index: {}]
  %s5 = inlined_call_operand.vmem [shape: f32[16,512], index: 5, kind: output, shape index: {}]
  %s6 = sld [smem:[#allocation0]]
  $region37: #{_lambda_.1} parent=0
    _
  %s8 = ssub.s32 1, %s6
  %s9 = scalar_select 0, %s8, %s6
  // Predicated region
  $region2: #{_lambda_.1} parent=0 // pred_check
    _
  $region3: #{_lambda_.1} parent=0 // pred_check_branch
    %11 = sbr.rel (0) target = $region5
  $region4: #{_lambda_.1} parent=0 // pred_region
    _
  $region5: #{_lambda_.1} parent=0 // pred_fallthru
    _
  // Predicated region
  $region6: #{_lambda_.1} parent=0 // pred_check
    _
  $region7: #{_lambda_.1} parent=0 // pred_check_branch
    %13 = sbr.rel (0) target = $region9
  $region8: #{_lambda_.1} parent=0 // pred_region
    _
  $region9: #{_lambda_.1} parent=0 // pred_fallthru
    _
  // Predicated region
  $region10: #{_lambda_.1} parent=0 // pred_check
    _
  $region11: #{_lambda_.1} parent=0 // pred_check_branch
    %15 = sbr.rel (0) target = $region13
  $region12: #{_lambda_.1} parent=0 // pred_region
    _
  $region13: #{_lambda_.1} parent=0 // pred_fallthru
    _
  // Predicated region
  $region14: #{_lambda_.1} parent=0 // pred_check
    _
  $region15: #{_lambda_.1} parent=0 // pred_check_branch
    %17 = sbr.rel (0) target = $region17
  $region16: #{_lambda_.1} parent=0 // pred_region
    _
  $region17: #{_lambda_.1} parent=0 // pred_fallthru
    _
  // Predicated region
  $region18: #{_lambda_.1} parent=0 // pred_check
    _
  $region19: #{_lambda_.1} parent=0 // pred_check_branch
    %19 = sbr.rel (0) target = $region21
  $region20: #{_lambda_.1} parent=0 // pred_region
    _
  $region21: #{_lambda_.1} parent=0 // pred_fallthru
    _
  %v20 = vld [vmem:[%s0] sm:$0xff]
  %v21 = vld [vmem:[%s0 + $0x8] sm:$0xff]
  %v22 = vld [vmem:[%s0 + $0x10] sm:$0xff]
  %v23 = vld [vmem:[%s0 + $0x18] sm:$0xff]
  %v24 = vld [vmem:[%s0 + $0x20] sm:$0xff]
  %v25 = vld [vmem:[%s0 + $0x28] sm:$0xff]
  %v26 = vld [vmem:[%s0 + $0x30] sm:$0xff]
  %v27 = vld [vmem:[%s0 + $0x38] sm:$0xff]
  loop: start=0, step=1, limit=20
  $region22: #{_lambda_.1} parent=0 // loop_pre_header
    _
  $region23: #{_lambda_.1} parent=0 // loop_header
    %s29 = sphi 0, %s33
    %p30 = scmp.ge.s32.totalorder %s29, 20
    %v34 = vphi %v20, %v2239
    %v35 = vphi %v21, %v2240
    %v36 = vphi %v22, %v2241
    %v37 = vphi %v23, %v2242
    %v38 = vphi %v24, %v2243
    %v39 = vphi %v25, %v2244
    %v40 = vphi %v26, %v2245
    %v41 = vphi %v27, %v2246
  $region24: #{_lambda_.1} parent=0 // loop_header_branch
    %32 = sbr.rel (%p30) target = $region28
  $region25: #{_lambda_.1} parent=0 // loop_body
    %42 = vrot.lane.b32.xlu0 %v34, 34
    %v43 = vpop.permute.xlu0 %42
    %44 = vrot.lane.b32.xlu0 %v38, 34
    %v45 = vpop.permute.xlu0 %44
    %46 = vrot.lane.b32.xlu0 %v35, 34
    %v47 = vpop.permute.xlu0 %46
    %48 = vrot.lane.b32.xlu0 %v39, 34
    %v49 = vpop.permute.xlu0 %48
    %50 = vrot.lane.b32.xlu0 %v36, 34
    %v51 = vpop.permute.xlu0 %50
    %52 = vrot.lane.b32.xlu0 %v40, 34
    %v53 = vpop.permute.xlu0 %52
    %54 = vrot.lane.b32.xlu0 %v37, 34
    %v55 = vpop.permute.xlu0 %54
    %56 = vrot.lane.b32.xlu0 %v41, 34
    %v57 = vpop.permute.xlu0 %56
    %v58 = vlaneseq
    %v59 = vand.u32 %v58, 127
    %vm60 = vcmp.lt.s32.totalorder %v59, 34
    %v61 = vsel %vm60, %v51, %v55
    %v62 = vsel %vm60, %v53, %v57
    %v63 = vsel %vm60, %v47, %v51
    %v64 = vsel %vm60, %v49, %v53
    %v65 = vsel %vm60, %v43, %v47
    %v66 = vsel %vm60, %v45, %v49
    %v67 = vsel %vm60, %v55, %v43
    %v68 = vsel %vm60, %v57, %v45
    %v69 = vld [vmem:[%s1] sm:$0xf]
    %v71 = vlaneseq
    %v72 = vshrl.u32 %v71, 7
    %v73 = vsub.s32 0, %v72
    %v74 = vrot.slane %v69, %v73
    %v75 = vlaneseq
    %v76 = vshrl.u32 %v75, 7
    %v77 = vsub.s32 1, %v76
    %v78 = vrot.slane %v69, %v77
    %v79 = vlaneseq
    %v80 = vshrl.u32 %v79, 7
    %v81 = vsub.s32 2, %v80
    %v82 = vrot.slane %v69, %v81
    %v83 = vlaneseq
    %v84 = vshrl.u32 %v83, 7
    %v85 = vsub.s32 3, %v84
    %v86 = vrot.slane %v69, %v85
    %v91 = vmul.f32 %v67, %v74
    %v92 = vmul.f32 %v65, %v78
    %v93 = vmul.f32 %v63, %v82
    %v94 = vmul.f32 %v61, %v86
    %v95 = vmul.f32 %v68, %v74
    %v96 = vmul.f32 %v66, %v78
    %v97 = vmul.f32 %v64, %v82
    %v98 = vmul.f32 %v62, %v86
    %99 = vst [vmem:[#allocation2] sm:$0xff] %v91
    %100 = vst [vmem:[#allocation2 + $0x8] sm:$0xff] %v92
    %101 = vst [vmem:[#allocation2 + $0x10] sm:$0xff] %v93
    %102 = vst [vmem:[#allocation2 + $0x18] sm:$0xff] %v94
    %103 = vst [vmem:[#allocation2 + $0x20] sm:$0xff] %v95
    %104 = vst [vmem:[#allocation2 + $0x28] sm:$0xff] %v96
    %105 = vst [vmem:[#allocation2 + $0x30] sm:$0xff] %v97
    %106 = vst [vmem:[#allocation2 + $0x38] sm:$0xff] %v98
    %107 = vrot.lane.b32.xlu0 %v34, 33
    %v108 = vpop.permute.xlu0 %107
    %109 = vrot.lane.b32.xlu0 %v38, 33
    %v110 = vpop.permute.xlu0 %109
    %111 = vrot.lane.b32.xlu0 %v35, 33
    %v112 = vpop.permute.xlu0 %111
    %113 = vrot.lane.b32.xlu0 %v39, 33
    %v114 = vpop.permute.xlu0 %113
    %115 = vrot.lane.b32.xlu0 %v36, 33
    %v116 = vpop.permute.xlu0 %115
    %117 = vrot.lane.b32.xlu0 %v40, 33
    %v118 = vpop.permute.xlu0 %117
    %119 = vrot.lane.b32.xlu0 %v37, 33
    %v120 = vpop.permute.xlu0 %119
    %121 = vrot.lane.b32.xlu0 %v41, 33
    %v122 = vpop.permute.xlu0 %121
    %vm123 = vcmp.lt.s32.totalorder %v59, 33
    %v124 = vsel %vm123, %v116, %v120
    %v125 = vsel %vm123, %v118, %v122
    %v126 = vsel %vm123, %v112, %v116
    %v127 = vsel %vm123, %v114, %v118
    %v128 = vsel %vm123, %v108, %v112
    %v129 = vsel %vm123, %v110, %v114
    %v130 = vsel %vm123, %v120, %v108
    %v131 = vsel %vm123, %v122, %v110
    %s132 = scalar_lea.vmem %s1, 4
    %v133 = vld [vmem:[%s132] sm:$0xf]
    %v135 = vlaneseq
    %v136 = vshrl.u32 %v135, 7
    %v137 = vsub.s32 0, %v136
    %v138 = vrot.slane %v133, %v137
    %v139 = vlaneseq
    %v140 = vshrl.u32 %v139, 7
    %v141 = vsub.s32 1, %v140
    %v142 = vrot.slane %v133, %v141
    %v143 = vlaneseq
    %v144 = vshrl.u32 %v143, 7
    %v145 = vsub.s32 2, %v144
    %v146 = vrot.slane %v133, %v145
    %v147 = vlaneseq
    %v148 = vshrl.u32 %v147, 7
    %v149 = vsub.s32 3, %v148
    %v150 = vrot.slane %v133, %v149
    %v155 = vmul.f32 %v130, %v138
    %v156 = vmul.f32 %v128, %v142
    %v157 = vmul.f32 %v126, %v146
    %v158 = vmul.f32 %v124, %v150
    %v159 = vmul.f32 %v131, %v138
    %v160 = vmul.f32 %v129, %v142
    %v161 = vmul.f32 %v127, %v146
    %v162 = vmul.f32 %v125, %v150
    %163 = vst [vmem:[#allocation2 + $0x40] sm:$0xff] %v155
    %164 = vst [vmem:[#allocation2 + $0x48] sm:$0xff] %v156
    %165 = vst [vmem:[#allocation2 + $0x50] sm:$0xff] %v157
    %166 = vst [vmem:[#allocation2 + $0x58] sm:$0xff] %v158
    %167 = vst [vmem:[#allocation2 + $0x60] sm:$0xff] %v159
    %168 = vst [vmem:[#allocation2 + $0x68] sm:$0xff] %v160
    %169 = vst [vmem:[#allocation2 + $0x70] sm:$0xff] %v161
    %170 = vst [vmem:[#allocation2 + $0x78] sm:$0xff] %v162
    %171 = vrot.lane.b32.xlu0 %v34, 32
    %v172 = vpop.permute.xlu0 %171
    %173 = vrot.lane.b32.xlu0 %v38, 32
    %v174 = vpop.permute.xlu0 %173
    %175 = vrot.lane.b32.xlu0 %v35, 32
    %v176 = vpop.permute.xlu0 %175
    %177 = vrot.lane.b32.xlu0 %v39, 32
    %v178 = vpop.permute.xlu0 %177
    %179 = vrot.lane.b32.xlu0 %v36, 32
    %v180 = vpop.permute.xlu0 %179
    %181 = vrot.lane.b32.xlu0 %v40, 32
    %v182 = vpop.permute.xlu0 %181
    %183 = vrot.lane.b32.xlu0 %v37, 32
    %v184 = vpop.permute.xlu0 %183
    %185 = vrot.lane.b32.xlu0 %v41, 32
    %v186 = vpop.permute.xlu0 %185
    %vm187 = vcmp.lt.s32.totalorder %v59, 32
    %v188 = vsel %vm187, %v180, %v184
    %v189 = vsel %vm187, %v182, %v186
    %v190 = vsel %vm187, %v176, %v180
    %v191 = vsel %vm187, %v178, %v182
    %v192 = vsel %vm187, %v172, %v176
    %v193 = vsel %vm187, %v174, %v178
    %v194 = vsel %vm187, %v184, %v172
    %v195 = vsel %vm187, %v186, %v174
    %s196 = scalar_lea.vmem %s1, 8
    %v197 = vld [vmem:[%s196] sm:$0xf]
    %v199 = vlaneseq
    %v200 = vshrl.u32 %v199, 7
    %v201 = vsub.s32 0, %v200
    %v202 = vrot.slane %v197, %v201
    %v203 = vlaneseq
    %v204 = vshrl.u32 %v203, 7
    %v205 = vsub.s32 1, %v204
    %v206 = vrot.slane %v197, %v205
    %v207 = vlaneseq
    %v208 = vshrl.u32 %v207, 7
    %v209 = vsub.s32 2, %v208
    %v210 = vrot.slane %v197, %v209
    %v211 = vlaneseq
    %v212 = vshrl.u32 %v211, 7
    %v213 = vsub.s32 3, %v212
    %v214 = vrot.slane %v197, %v213
    %v219 = vmul.f32 %v194, %v202
    %v220 = vmul.f32 %v192, %v206
    %v221 = vmul.f32 %v190, %v210
    %v222 = vmul.f32 %v188, %v214
    %v223 = vmul.f32 %v195, %v202
    %v224 = vmul.f32 %v193, %v206
    %v225 = vmul.f32 %v191, %v210
    %v226 = vmul.f32 %v189, %v214
    %227 = vst [vmem:[#allocation2 + $0x80] sm:$0xff] %v219
    %228 = vst [vmem:[#allocation2 + $0x88] sm:$0xff] %v220
    %229 = vst [vmem:[#allocation2 + $0x90] sm:$0xff] %v221
    %230 = vst [vmem:[#allocation2 + $0x98] sm:$0xff] %v222
    %231 = vst [vmem:[#allocation2 + $0xa0] sm:$0xff] %v223
    %232 = vst [vmem:[#allocation2 + $0xa8] sm:$0xff] %v224
    %233 = vst [vmem:[#allocation2 + $0xb0] sm:$0xff] %v225
    %234 = vst [vmem:[#allocation2 + $0xb8] sm:$0xff] %v226
    %235 = vrot.lane.b32.xlu0 %v34, 31
    %v236 = vpop.permute.xlu0 %235
    %237 = vrot.lane.b32.xlu0 %v38, 31
    %v238 = vpop.permute.xlu0 %237
    %239 = vrot.lane.b32.xlu0 %v35, 31
    %v240 = vpop.permute.xlu0 %239
    %241 = vrot.lane.b32.xlu0 %v39, 31
    %v242 = vpop.permute.xlu0 %241
    %243 = vrot.lane.b32.xlu0 %v36, 31
    %v244 = vpop.permute.xlu0 %243
    %245 = vrot.lane.b32.xlu0 %v40, 31
    %v246 = vpop.permute.xlu0 %245
    %247 = vrot.lane.b32.xlu0 %v37, 31
    %v248 = vpop.permute.xlu0 %247
    %249 = vrot.lane.b32.xlu0 %v41, 31
    %v250 = vpop.permute.xlu0 %249
    %vm251 = vcmp.lt.s32.totalorder %v59, 31
    %v252 = vsel %vm251, %v244, %v248
    %v253 = vsel %vm251, %v246, %v250
    %v254 = vsel %vm251, %v240, %v244
    %v255 = vsel %vm251, %v242, %v246
    %v256 = vsel %vm251, %v236, %v240
    %v257 = vsel %vm251, %v238, %v242
    %v258 = vsel %vm251, %v248, %v236
    %v259 = vsel %vm251, %v250, %v238
    %s260 = scalar_lea.vmem %s1, 12
    %v261 = vld [vmem:[%s260] sm:$0xf]
    %v263 = vlaneseq
    %v264 = vshrl.u32 %v263, 7
    %v265 = vsub.s32 0, %v264
    %v266 = vrot.slane %v261, %v265
    %v267 = vlaneseq
    %v268 = vshrl.u32 %v267, 7
    %v269 = vsub.s32 1, %v268
    %v270 = vrot.slane %v261, %v269
    %v271 = vlaneseq
    %v272 = vshrl.u32 %v271, 7
    %v273 = vsub.s32 2, %v272
    %v274 = vrot.slane %v261, %v273
    %v275 = vlaneseq
    %v276 = vshrl.u32 %v275, 7
    %v277 = vsub.s32 3, %v276
    %v278 = vrot.slane %v261, %v277
    %v283 = vmul.f32 %v258, %v266
    %v284 = vmul.f32 %v256, %v270
    %v285 = vmul.f32 %v254, %v274
    %v286 = vmul.f32 %v252, %v278
    %v287 = vmul.f32 %v259, %v266
    %v288 = vmul.f32 %v257, %v270
    %v289 = vmul.f32 %v255, %v274
    %v290 = vmul.f32 %v253, %v278
    %291 = vst [vmem:[#allocation2 + $0xc0] sm:$0xff] %v283
    %292 = vst [vmem:[#allocation2 + $0xc8] sm:$0xff] %v284
    %293 = vst [vmem:[#allocation2 + $0xd0] sm:$0xff] %v285
    %294 = vst [vmem:[#allocation2 + $0xd8] sm:$0xff] %v286
    %295 = vst [vmem:[#allocation2 + $0xe0] sm:$0xff] %v287
    %296 = vst [vmem:[#allocation2 + $0xe8] sm:$0xff] %v288
    %297 = vst [vmem:[#allocation2 + $0xf0] sm:$0xff] %v289
    %298 = vst [vmem:[#allocation2 + $0xf8] sm:$0xff] %v290
    %299 = vrot.lane.b32.xlu0 %v34, 30
    %v300 = vpop.permute.xlu0 %299
    %301 = vrot.lane.b32.xlu0 %v38, 30
    %v302 = vpop.permute.xlu0 %301
    %303 = vrot.lane.b32.xlu0 %v35, 30
    %v304 = vpop.permute.xlu0 %303
    %305 = vrot.lane.b32.xlu0 %v39, 30
    %v306 = vpop.permute.xlu0 %305
    %307 = vrot.lane.b32.xlu0 %v36, 30
    %v308 = vpop.permute.xlu0 %307
    %309 = vrot.lane.b32.xlu0 %v40, 30
    %v310 = vpop.permute.xlu0 %309
    %311 = vrot.lane.b32.xlu0 %v37, 30
    %v312 = vpop.permute.xlu0 %311
    %313 = vrot.lane.b32.xlu0 %v41, 30
    %v314 = vpop.permute.xlu0 %313
    %vm315 = vcmp.lt.s32.totalorder %v59, 30
    %v316 = vsel %vm315, %v308, %v312
    %v317 = vsel %vm315, %v310, %v314
    %v318 = vsel %vm315, %v304, %v308
    %v319 = vsel %vm315, %v306, %v310
    %v320 = vsel %vm315, %v300, %v304
    %v321 = vsel %vm315, %v302, %v306
    %v322 = vsel %vm315, %v312, %v300
    %v323 = vsel %vm315, %v314, %v302
    %s324 = scalar_lea.vmem %s1, 16
    %v325 = vld [vmem:[%s324] sm:$0xf]
    %v327 = vlaneseq
    %v328 = vshrl.u32 %v327, 7
    %v329 = vsub.s32 0, %v328
    %v330 = vrot.slane %v325, %v329
    %v331 = vlaneseq
    %v332 = vshrl.u32 %v331, 7
    %v333 = vsub.s32 1, %v332
    %v334 = vrot.slane %v325, %v333
    %v335 = vlaneseq
    %v336 = vshrl.u32 %v335, 7
    %v337 = vsub.s32 2, %v336
    %v338 = vrot.slane %v325, %v337
    %v339 = vlaneseq
    %v340 = vshrl.u32 %v339, 7
    %v341 = vsub.s32 3, %v340
    %v342 = vrot.slane %v325, %v341
    %v347 = vmul.f32 %v322, %v330
    %v348 = vmul.f32 %v320, %v334
    %v349 = vmul.f32 %v318, %v338
    %v350 = vmul.f32 %v316, %v342
    %v351 = vmul.f32 %v323, %v330
    %v352 = vmul.f32 %v321, %v334
    %v353 = vmul.f32 %v319, %v338
    %v354 = vmul.f32 %v317, %v342
    %355 = vst [vmem:[#allocation2 + $0x100] sm:$0xff] %v347
    %356 = vst [vmem:[#allocation2 + $0x108] sm:$0xff] %v348
    %357 = vst [vmem:[#allocation2 + $0x110] sm:$0xff] %v349
    %358 = vst [vmem:[#allocation2 + $0x118] sm:$0xff] %v350
    %359 = vst [vmem:[#allocation2 + $0x120] sm:$0xff] %v351
    %360 = vst [vmem:[#allocation2 + $0x128] sm:$0xff] %v352
    %361 = vst [vmem:[#allocation2 + $0x130] sm:$0xff] %v353
    %362 = vst [vmem:[#allocation2 + $0x138] sm:$0xff] %v354
    %363 = vrot.lane.b32.xlu0 %v34, 18
    %v364 = vpop.permute.xlu0 %363
    %365 = vrot.lane.b32.xlu0 %v38, 18
    %v366 = vpop.permute.xlu0 %365
    %367 = vrot.lane.b32.xlu0 %v35, 18
    %v368 = vpop.permute.xlu0 %367
    %369 = vrot.lane.b32.xlu0 %v39, 18
    %v370 = vpop.permute.xlu0 %369
    %371 = vrot.lane.b32.xlu0 %v36, 18
    %v372 = vpop.permute.xlu0 %371
    %373 = vrot.lane.b32.xlu0 %v40, 18
    %v374 = vpop.permute.xlu0 %373
    %375 = vrot.lane.b32.xlu0 %v37, 18
    %v376 = vpop.permute.xlu0 %375
    %377 = vrot.lane.b32.xlu0 %v41, 18
    %v378 = vpop.permute.xlu0 %377
    %vm379 = vcmp.lt.s32.totalorder %v59, 18
    %v380 = vsel %vm379, %v372, %v376
    %v381 = vsel %vm379, %v374, %v378
    %v382 = vsel %vm379, %v368, %v372
    %v383 = vsel %vm379, %v370, %v374
    %v384 = vsel %vm379, %v364, %v368
    %v385 = vsel %vm379, %v366, %v370
    %v386 = vsel %vm379, %v376, %v364
    %v387 = vsel %vm379, %v378, %v366
    %s388 = scalar_lea.vmem %s1, 20
    %v389 = vld [vmem:[%s388] sm:$0xf]
    %v391 = vlaneseq
    %v392 = vshrl.u32 %v391, 7
    %v393 = vsub.s32 0, %v392
    %v394 = vrot.slane %v389, %v393
    %v395 = vlaneseq
    %v396 = vshrl.u32 %v395, 7
    %v397 = vsub.s32 1, %v396
    %v398 = vrot.slane %v389, %v397
    %v399 = vlaneseq
    %v400 = vshrl.u32 %v399, 7
    %v401 = vsub.s32 2, %v400
    %v402 = vrot.slane %v389, %v401
    %v403 = vlaneseq
    %v404 = vshrl.u32 %v403, 7
    %v405 = vsub.s32 3, %v404
    %v406 = vrot.slane %v389, %v405
    %v411 = vmul.f32 %v386, %v394
    %v412 = vmul.f32 %v384, %v398
    %v413 = vmul.f32 %v382, %v402
    %v414 = vmul.f32 %v380, %v406
    %v415 = vmul.f32 %v387, %v394
    %v416 = vmul.f32 %v385, %v398
    %v417 = vmul.f32 %v383, %v402
    %v418 = vmul.f32 %v381, %v406
    %419 = vst [vmem:[#allocation2 + $0x140] sm:$0xff] %v411
    %420 = vst [vmem:[#allocation2 + $0x148] sm:$0xff] %v412
    %421 = vst [vmem:[#allocation2 + $0x150] sm:$0xff] %v413
    %422 = vst [vmem:[#allocation2 + $0x158] sm:$0xff] %v414
    %423 = vst [vmem:[#allocation2 + $0x160] sm:$0xff] %v415
    %424 = vst [vmem:[#allocation2 + $0x168] sm:$0xff] %v416
    %425 = vst [vmem:[#allocation2 + $0x170] sm:$0xff] %v417
    %426 = vst [vmem:[#allocation2 + $0x178] sm:$0xff] %v418
    %427 = vrot.lane.b32.xlu0 %v34, 17
    %v428 = vpop.permute.xlu0 %427
    %429 = vrot.lane.b32.xlu0 %v38, 17
    %v430 = vpop.permute.xlu0 %429
    %431 = vrot.lane.b32.xlu0 %v35, 17
    %v432 = vpop.permute.xlu0 %431
    %433 = vrot.lane.b32.xlu0 %v39, 17
    %v434 = vpop.permute.xlu0 %433
    %435 = vrot.lane.b32.xlu0 %v36, 17
    %v436 = vpop.permute.xlu0 %435
    %437 = vrot.lane.b32.xlu0 %v40, 17
    %v438 = vpop.permute.xlu0 %437
    %439 = vrot.lane.b32.xlu0 %v37, 17
    %v440 = vpop.permute.xlu0 %439
    %441 = vrot.lane.b32.xlu0 %v41, 17
    %v442 = vpop.permute.xlu0 %441
    %vm443 = vcmp.lt.s32.totalorder %v59, 17
    %v444 = vsel %vm443, %v436, %v440
    %v445 = vsel %vm443, %v438, %v442
    %v446 = vsel %vm443, %v432, %v436
    %v447 = vsel %vm443, %v434, %v438
    %v448 = vsel %vm443, %v428, %v432
    %v449 = vsel %vm443, %v430, %v434
    %v450 = vsel %vm443, %v440, %v428
    %v451 = vsel %vm443, %v442, %v430
    %s452 = scalar_lea.vmem %s1, 24
    %v453 = vld [vmem:[%s452] sm:$0xf]
    %v455 = vlaneseq
    %v456 = vshrl.u32 %v455, 7
    %v457 = vsub.s32 0, %v456
    %v458 = vrot.slane %v453, %v457
    %v459 = vlaneseq
    %v460 = vshrl.u32 %v459, 7
    %v461 = vsub.s32 1, %v460
    %v462 = vrot.slane %v453, %v461
    %v463 = vlaneseq
    %v464 = vshrl.u32 %v463, 7
    %v465 = vsub.s32 2, %v464
    %v466 = vrot.slane %v453, %v465
    %v467 = vlaneseq
    %v468 = vshrl.u32 %v467, 7
    %v469 = vsub.s32 3, %v468
    %v470 = vrot.slane %v453, %v469
    %v475 = vmul.f32 %v450, %v458
    %v476 = vmul.f32 %v448, %v462
    %v477 = vmul.f32 %v446, %v466
    %v478 = vmul.f32 %v444, %v470
    %v479 = vmul.f32 %v451, %v458
    %v480 = vmul.f32 %v449, %v462
    %v481 = vmul.f32 %v447, %v466
    %v482 = vmul.f32 %v445, %v470
    %483 = vst [vmem:[#allocation2 + $0x180] sm:$0xff] %v475
    %484 = vst [vmem:[#allocation2 + $0x188] sm:$0xff] %v476
    %485 = vst [vmem:[#allocation2 + $0x190] sm:$0xff] %v477
    %486 = vst [vmem:[#allocation2 + $0x198] sm:$0xff] %v478
    %487 = vst [vmem:[#allocation2 + $0x1a0] sm:$0xff] %v479
    %488 = vst [vmem:[#allocation2 + $0x1a8] sm:$0xff] %v480
    %489 = vst [vmem:[#allocation2 + $0x1b0] sm:$0xff] %v481
    %490 = vst [vmem:[#allocation2 + $0x1b8] sm:$0xff] %v482
    %491 = vrot.lane.b32.xlu0 %v34, 16
    %v492 = vpop.permute.xlu0 %491
    %493 = vrot.lane.b32.xlu0 %v38, 16
    %v494 = vpop.permute.xlu0 %493
    %495 = vrot.lane.b32.xlu0 %v35, 16
    %v496 = vpop.permute.xlu0 %495
    %497 = vrot.lane.b32.xlu0 %v39, 16
    %v498 = vpop.permute.xlu0 %497
    %499 = vrot.lane.b32.xlu0 %v36, 16
    %v500 = vpop.permute.xlu0 %499
    %501 = vrot.lane.b32.xlu0 %v40, 16
    %v502 = vpop.permute.xlu0 %501
    %503 = vrot.lane.b32.xlu0 %v37, 16
    %v504 = vpop.permute.xlu0 %503
    %505 = vrot.lane.b32.xlu0 %v41, 16
    %v506 = vpop.permute.xlu0 %505
    %vm507 = vcmp.lt.s32.totalorder %v59, 16
    %v508 = vsel %vm507, %v500, %v504
    %v509 = vsel %vm507, %v502, %v506
    %v510 = vsel %vm507, %v496, %v500
    %v511 = vsel %vm507, %v498, %v502
    %v512 = vsel %vm507, %v492, %v496
    %v513 = vsel %vm507, %v494, %v498
    %v514 = vsel %vm507, %v504, %v492
    %v515 = vsel %vm507, %v506, %v494
    %s516 = scalar_lea.vmem %s1, 28
    %v517 = vld [vmem:[%s516] sm:$0xf]
    %v519 = vlaneseq
    %v520 = vshrl.u32 %v519, 7
    %v521 = vsub.s32 0, %v520
    %v522 = vrot.slane %v517, %v521
    %v523 = vlaneseq
    %v524 = vshrl.u32 %v523, 7
    %v525 = vsub.s32 1, %v524
    %v526 = vrot.slane %v517, %v525
    %v527 = vlaneseq
    %v528 = vshrl.u32 %v527, 7
    %v529 = vsub.s32 2, %v528
    %v530 = vrot.slane %v517, %v529
    %v531 = vlaneseq
    %v532 = vshrl.u32 %v531, 7
    %v533 = vsub.s32 3, %v532
    %v534 = vrot.slane %v517, %v533
    %v539 = vmul.f32 %v514, %v522
    %v540 = vmul.f32 %v512, %v526
    %v541 = vmul.f32 %v510, %v530
    %v542 = vmul.f32 %v508, %v534
    %v543 = vmul.f32 %v515, %v522
    %v544 = vmul.f32 %v513, %v526
    %v545 = vmul.f32 %v511, %v530
    %v546 = vmul.f32 %v509, %v534
    %547 = vst [vmem:[#allocation2 + $0x1c0] sm:$0xff] %v539
    %548 = vst [vmem:[#allocation2 + $0x1c8] sm:$0xff] %v540
    %549 = vst [vmem:[#allocation2 + $0x1d0] sm:$0xff] %v541
    %550 = vst [vmem:[#allocation2 + $0x1d8] sm:$0xff] %v542
    %551 = vst [vmem:[#allocation2 + $0x1e0] sm:$0xff] %v543
    %552 = vst [vmem:[#allocation2 + $0x1e8] sm:$0xff] %v544
    %553 = vst [vmem:[#allocation2 + $0x1f0] sm:$0xff] %v545
    %554 = vst [vmem:[#allocation2 + $0x1f8] sm:$0xff] %v546
    %555 = vrot.lane.b32.xlu0 %v34, 15
    %v556 = vpop.permute.xlu0 %555
    %557 = vrot.lane.b32.xlu0 %v38, 15
    %v558 = vpop.permute.xlu0 %557
    %559 = vrot.lane.b32.xlu0 %v35, 15
    %v560 = vpop.permute.xlu0 %559
    %561 = vrot.lane.b32.xlu0 %v39, 15
    %v562 = vpop.permute.xlu0 %561
    %563 = vrot.lane.b32.xlu0 %v36, 15
    %v564 = vpop.permute.xlu0 %563
    %565 = vrot.lane.b32.xlu0 %v40, 15
    %v566 = vpop.permute.xlu0 %565
    %567 = vrot.lane.b32.xlu0 %v37, 15
    %v568 = vpop.permute.xlu0 %567
    %569 = vrot.lane.b32.xlu0 %v41, 15
    %v570 = vpop.permute.xlu0 %569
    %vm571 = vcmp.lt.s32.totalorder %v59, 15
    %v572 = vsel %vm571, %v564, %v568
    %v573 = vsel %vm571, %v566, %v570
    %v574 = vsel %vm571, %v560, %v564
    %v575 = vsel %vm571, %v562, %v566
    %v576 = vsel %vm571, %v556, %v560
    %v577 = vsel %vm571, %v558, %v562
    %v578 = vsel %vm571, %v568, %v556
    %v579 = vsel %vm571, %v570, %v558
    %s580 = scalar_lea.vmem %s1, 32
    %v581 = vld [vmem:[%s580] sm:$0xf]
    %v583 = vlaneseq
    %v584 = vshrl.u32 %v583, 7
    %v585 = vsub.s32 0, %v584
    %v586 = vrot.slane %v581, %v585
    %v587 = vlaneseq
    %v588 = vshrl.u32 %v587, 7
    %v589 = vsub.s32 1, %v588
    %v590 = vrot.slane %v581, %v589
    %v591 = vlaneseq
    %v592 = vshrl.u32 %v591, 7
    %v593 = vsub.s32 2, %v592
    %v594 = vrot.slane %v581, %v593
    %v595 = vlaneseq
    %v596 = vshrl.u32 %v595, 7
    %v597 = vsub.s32 3, %v596
    %v598 = vrot.slane %v581, %v597
    %v603 = vmul.f32 %v578, %v586
    %v604 = vmul.f32 %v576, %v590
    %v605 = vmul.f32 %v574, %v594
    %v606 = vmul.f32 %v572, %v598
    %v607 = vmul.f32 %v579, %v586
    %v608 = vmul.f32 %v577, %v590
    %v609 = vmul.f32 %v575, %v594
    %v610 = vmul.f32 %v573, %v598
    %611 = vst [vmem:[#allocation2 + $0x200] sm:$0xff] %v603
    %612 = vst [vmem:[#allocation2 + $0x208] sm:$0xff] %v604
    %613 = vst [vmem:[#allocation2 + $0x210] sm:$0xff] %v605
    %614 = vst [vmem:[#allocation2 + $0x218] sm:$0xff] %v606
    %615 = vst [vmem:[#allocation2 + $0x220] sm:$0xff] %v607
    %616 = vst [vmem:[#allocation2 + $0x228] sm:$0xff] %v608
    %617 = vst [vmem:[#allocation2 + $0x230] sm:$0xff] %v609
    %618 = vst [vmem:[#allocation2 + $0x238] sm:$0xff] %v610
    %619 = vrot.lane.b32.xlu0 %v34, 14
    %v620 = vpop.permute.xlu0 %619
    %621 = vrot.lane.b32.xlu0 %v38, 14
    %v622 = vpop.permute.xlu0 %621
    %623 = vrot.lane.b32.xlu0 %v35, 14
    %v624 = vpop.permute.xlu0 %623
    %625 = vrot.lane.b32.xlu0 %v39, 14
    %v626 = vpop.permute.xlu0 %625
    %627 = vrot.lane.b32.xlu0 %v36, 14
    %v628 = vpop.permute.xlu0 %627
    %629 = vrot.lane.b32.xlu0 %v40, 14
    %v630 = vpop.permute.xlu0 %629
    %631 = vrot.lane.b32.xlu0 %v37, 14
    %v632 = vpop.permute.xlu0 %631
    %633 = vrot.lane.b32.xlu0 %v41, 14
    %v634 = vpop.permute.xlu0 %633
    %vm635 = vcmp.lt.s32.totalorder %v59, 14
    %v636 = vsel %vm635, %v628, %v632
    %v637 = vsel %vm635, %v630, %v634
    %v638 = vsel %vm635, %v624, %v628
    %v639 = vsel %vm635, %v626, %v630
    %v640 = vsel %vm635, %v620, %v624
    %v641 = vsel %vm635, %v622, %v626
    %v642 = vsel %vm635, %v632, %v620
    %v643 = vsel %vm635, %v634, %v622
    %s644 = scalar_lea.vmem %s1, 36
    %v645 = vld [vmem:[%s644] sm:$0xf]
    %v647 = vlaneseq
    %v648 = vshrl.u32 %v647, 7
    %v649 = vsub.s32 0, %v648
    %v650 = vrot.slane %v645, %v649
    %v651 = vlaneseq
    %v652 = vshrl.u32 %v651, 7
    %v653 = vsub.s32 1, %v652
    %v654 = vrot.slane %v645, %v653
    %v655 = vlaneseq
    %v656 = vshrl.u32 %v655, 7
    %v657 = vsub.s32 2, %v656
    %v658 = vrot.slane %v645, %v657
    %v659 = vlaneseq
    %v660 = vshrl.u32 %v659, 7
    %v661 = vsub.s32 3, %v660
    %v662 = vrot.slane %v645, %v661
    %v667 = vmul.f32 %v642, %v650
    %v668 = vmul.f32 %v640, %v654
    %v669 = vmul.f32 %v638, %v658
    %v670 = vmul.f32 %v636, %v662
    %v671 = vmul.f32 %v643, %v650
    %v672 = vmul.f32 %v641, %v654
    %v673 = vmul.f32 %v639, %v658
    %v674 = vmul.f32 %v637, %v662
    %675 = vst [vmem:[#allocation2 + $0x240] sm:$0xff] %v667
    %676 = vst [vmem:[#allocation2 + $0x248] sm:$0xff] %v668
    %677 = vst [vmem:[#allocation2 + $0x250] sm:$0xff] %v669
    %678 = vst [vmem:[#allocation2 + $0x258] sm:$0xff] %v670
    %679 = vst [vmem:[#allocation2 + $0x260] sm:$0xff] %v671
    %680 = vst [vmem:[#allocation2 + $0x268] sm:$0xff] %v672
    %681 = vst [vmem:[#allocation2 + $0x270] sm:$0xff] %v673
    %682 = vst [vmem:[#allocation2 + $0x278] sm:$0xff] %v674
    %683 = vrot.lane.b32.xlu0 %v34, 2
    %v684 = vpop.permute.xlu0 %683
    %685 = vrot.lane.b32.xlu0 %v38, 2
    %v686 = vpop.permute.xlu0 %685
    %687 = vrot.lane.b32.xlu0 %v35, 2
    %v688 = vpop.permute.xlu0 %687
    %689 = vrot.lane.b32.xlu0 %v39, 2
    %v690 = vpop.permute.xlu0 %689
    %691 = vrot.lane.b32.xlu0 %v36, 2
    %v692 = vpop.permute.xlu0 %691
    %693 = vrot.lane.b32.xlu0 %v40, 2
    %v694 = vpop.permute.xlu0 %693
    %695 = vrot.lane.b32.xlu0 %v37, 2
    %v696 = vpop.permute.xlu0 %695
    %697 = vrot.lane.b32.xlu0 %v41, 2
    %v698 = vpop.permute.xlu0 %697
    %vm699 = vcmp.lt.s32.totalorder %v59, 2
    %v700 = vsel %vm699, %v692, %v696
    %v701 = vsel %vm699, %v694, %v698
    %v702 = vsel %vm699, %v688, %v692
    %v703 = vsel %vm699, %v690, %v694
    %v704 = vsel %vm699, %v684, %v688
    %v705 = vsel %vm699, %v686, %v690
    %v706 = vsel %vm699, %v696, %v684
    %v707 = vsel %vm699, %v698, %v686
    %s708 = scalar_lea.vmem %s1, 40
    %v709 = vld [vmem:[%s708] sm:$0xf]
    %v711 = vlaneseq
    %v712 = vshrl.u32 %v711, 7
    %v713 = vsub.s32 0, %v712
    %v714 = vrot.slane %v709, %v713
    %v715 = vlaneseq
    %v716 = vshrl.u32 %v715, 7
    %v717 = vsub.s32 1, %v716
    %v718 = vrot.slane %v709, %v717
    %v719 = vlaneseq
    %v720 = vshrl.u32 %v719, 7
    %v721 = vsub.s32 2, %v720
    %v722 = vrot.slane %v709, %v721
    %v723 = vlaneseq
    %v724 = vshrl.u32 %v723, 7
    %v725 = vsub.s32 3, %v724
    %v726 = vrot.slane %v709, %v725
    %v731 = vmul.f32 %v706, %v714
    %v732 = vmul.f32 %v704, %v718
    %v733 = vmul.f32 %v702, %v722
    %v734 = vmul.f32 %v700, %v726
    %v735 = vmul.f32 %v707, %v714
    %v736 = vmul.f32 %v705, %v718
    %v737 = vmul.f32 %v703, %v722
    %v738 = vmul.f32 %v701, %v726
    %739 = vst [vmem:[#allocation2 + $0x280] sm:$0xff] %v731
    %740 = vst [vmem:[#allocation2 + $0x288] sm:$0xff] %v732
    %741 = vst [vmem:[#allocation2 + $0x290] sm:$0xff] %v733
    %742 = vst [vmem:[#allocation2 + $0x298] sm:$0xff] %v734
    %743 = vst [vmem:[#allocation2 + $0x2a0] sm:$0xff] %v735
    %744 = vst [vmem:[#allocation2 + $0x2a8] sm:$0xff] %v736
    %745 = vst [vmem:[#allocation2 + $0x2b0] sm:$0xff] %v737
    %746 = vst [vmem:[#allocation2 + $0x2b8] sm:$0xff] %v738
    %747 = vrot.lane.b32.xlu0 %v34, 1
    %v748 = vpop.permute.xlu0 %747
    %749 = vrot.lane.b32.xlu0 %v38, 1
    %v750 = vpop.permute.xlu0 %749
    %751 = vrot.lane.b32.xlu0 %v35, 1
    %v752 = vpop.permute.xlu0 %751
    %753 = vrot.lane.b32.xlu0 %v39, 1
    %v754 = vpop.permute.xlu0 %753
    %755 = vrot.lane.b32.xlu0 %v36, 1
    %v756 = vpop.permute.xlu0 %755
    %757 = vrot.lane.b32.xlu0 %v40, 1
    %v758 = vpop.permute.xlu0 %757
    %759 = vrot.lane.b32.xlu0 %v37, 1
    %v760 = vpop.permute.xlu0 %759
    %761 = vrot.lane.b32.xlu0 %v41, 1
    %v762 = vpop.permute.xlu0 %761
    %vm763 = vcmp.lt.s32.totalorder %v59, 1
    %v764 = vsel %vm763, %v756, %v760
    %v765 = vsel %vm763, %v758, %v762
    %v766 = vsel %vm763, %v752, %v756
    %v767 = vsel %vm763, %v754, %v758
    %v768 = vsel %vm763, %v748, %v752
    %v769 = vsel %vm763, %v750, %v754
    %v770 = vsel %vm763, %v760, %v748
    %v771 = vsel %vm763, %v762, %v750
    %s772 = scalar_lea.vmem %s1, 44
    %v773 = vld [vmem:[%s772] sm:$0xf]
    %v775 = vlaneseq
    %v776 = vshrl.u32 %v775, 7
    %v777 = vsub.s32 0, %v776
    %v778 = vrot.slane %v773, %v777
    %v779 = vlaneseq
    %v780 = vshrl.u32 %v779, 7
    %v781 = vsub.s32 1, %v780
    %v782 = vrot.slane %v773, %v781
    %v783 = vlaneseq
    %v784 = vshrl.u32 %v783, 7
    %v785 = vsub.s32 2, %v784
    %v786 = vrot.slane %v773, %v785
    %v787 = vlaneseq
    %v788 = vshrl.u32 %v787, 7
    %v789 = vsub.s32 3, %v788
    %v790 = vrot.slane %v773, %v789
    %v795 = vmul.f32 %v770, %v778
    %v796 = vmul.f32 %v768, %v782
    %v797 = vmul.f32 %v766, %v786
    %v798 = vmul.f32 %v764, %v790
    %v799 = vmul.f32 %v771, %v778
    %v800 = vmul.f32 %v769, %v782
    %v801 = vmul.f32 %v767, %v786
    %v802 = vmul.f32 %v765, %v790
    %803 = vst [vmem:[#allocation2 + $0x2c0] sm:$0xff] %v795
    %804 = vst [vmem:[#allocation2 + $0x2c8] sm:$0xff] %v796
    %805 = vst [vmem:[#allocation2 + $0x2d0] sm:$0xff] %v797
    %806 = vst [vmem:[#allocation2 + $0x2d8] sm:$0xff] %v798
    %807 = vst [vmem:[#allocation2 + $0x2e0] sm:$0xff] %v799
    %808 = vst [vmem:[#allocation2 + $0x2e8] sm:$0xff] %v800
    %809 = vst [vmem:[#allocation2 + $0x2f0] sm:$0xff] %v801
    %810 = vst [vmem:[#allocation2 + $0x2f8] sm:$0xff] %v802
    %s811 = scalar_lea.vmem %s1, 48
    %v812 = vld [vmem:[%s811] sm:$0xf]
    %v814 = vlaneseq
    %v815 = vshrl.u32 %v814, 7
    %v816 = vsub.s32 0, %v815
    %v817 = vrot.slane %v812, %v816
    %v818 = vlaneseq
    %v819 = vshrl.u32 %v818, 7
    %v820 = vsub.s32 1, %v819
    %v821 = vrot.slane %v812, %v820
    %v822 = vlaneseq
    %v823 = vshrl.u32 %v822, 7
    %v824 = vsub.s32 2, %v823
    %v825 = vrot.slane %v812, %v824
    %v826 = vlaneseq
    %v827 = vshrl.u32 %v826, 7
    %v828 = vsub.s32 3, %v827
    %v829 = vrot.slane %v812, %v828
    %v834 = vmul.f32 %v34, %v817
    %v835 = vmul.f32 %v35, %v821
    %v836 = vmul.f32 %v36, %v825
    %v837 = vmul.f32 %v37, %v829
    %v838 = vmul.f32 %v38, %v817
    %v839 = vmul.f32 %v39, %v821
    %v840 = vmul.f32 %v40, %v825
    %v841 = vmul.f32 %v41, %v829
    %842 = vst [vmem:[#allocation2 + $0x300] sm:$0xff] %v834
    %843 = vst [vmem:[#allocation2 + $0x308] sm:$0xff] %v835
    %844 = vst [vmem:[#allocation2 + $0x310] sm:$0xff] %v836
    %845 = vst [vmem:[#allocation2 + $0x318] sm:$0xff] %v837
    %846 = vst [vmem:[#allocation2 + $0x320] sm:$0xff] %v838
    %847 = vst [vmem:[#allocation2 + $0x328] sm:$0xff] %v839
    %848 = vst [vmem:[#allocation2 + $0x330] sm:$0xff] %v840
    %849 = vst [vmem:[#allocation2 + $0x338] sm:$0xff] %v841
    %850 = vrot.lane.b32.xlu0 %v34, 127
    %v851 = vpop.permute.xlu0 %850
    %852 = vrot.lane.b32.xlu0 %v38, 127
    %v853 = vpop.permute.xlu0 %852
    %854 = vrot.lane.b32.xlu0 %v35, 127
    %v855 = vpop.permute.xlu0 %854
    %856 = vrot.lane.b32.xlu0 %v39, 127
    %v857 = vpop.permute.xlu0 %856
    %858 = vrot.lane.b32.xlu0 %v36, 127
    %v859 = vpop.permute.xlu0 %858
    %860 = vrot.lane.b32.xlu0 %v40, 127
    %v861 = vpop.permute.xlu0 %860
    %862 = vrot.lane.b32.xlu0 %v37, 127
    %v863 = vpop.permute.xlu0 %862
    %864 = vrot.lane.b32.xlu0 %v41, 127
    %v865 = vpop.permute.xlu0 %864
    %vm866 = vcmp.lt.s32.totalorder %v59, 127
    %v867 = vsel %vm866, %v859, %v863
    %v868 = vsel %vm866, %v861, %v865
    %v869 = vsel %vm866, %v855, %v859
    %v870 = vsel %vm866, %v857, %v861
    %v871 = vsel %vm866, %v851, %v855
    %v872 = vsel %vm866, %v853, %v857
    %v873 = vsel %vm866, %v863, %v851
    %v874 = vsel %vm866, %v865, %v853
    %s875 = scalar_lea.vmem %s1, 52
    %v876 = vld [vmem:[%s875] sm:$0xf]
    %v878 = vlaneseq
    %v879 = vshrl.u32 %v878, 7
    %v880 = vsub.s32 0, %v879
    %v881 = vrot.slane %v876, %v880
    %v882 = vlaneseq
    %v883 = vshrl.u32 %v882, 7
    %v884 = vsub.s32 1, %v883
    %v885 = vrot.slane %v876, %v884
    %v886 = vlaneseq
    %v887 = vshrl.u32 %v886, 7
    %v888 = vsub.s32 2, %v887
    %v889 = vrot.slane %v876, %v888
    %v890 = vlaneseq
    %v891 = vshrl.u32 %v890, 7
    %v892 = vsub.s32 3, %v891
    %v893 = vrot.slane %v876, %v892
    %v898 = vmul.f32 %v871, %v881
    %v899 = vmul.f32 %v869, %v885
    %v900 = vmul.f32 %v867, %v889
    %v901 = vmul.f32 %v873, %v893
    %v902 = vmul.f32 %v872, %v881
    %v903 = vmul.f32 %v870, %v885
    %v904 = vmul.f32 %v868, %v889
    %v905 = vmul.f32 %v874, %v893
    %906 = vst [vmem:[#allocation2 + $0x340] sm:$0xff] %v898
    %907 = vst [vmem:[#allocation2 + $0x348] sm:$0xff] %v899
    %908 = vst [vmem:[#allocation2 + $0x350] sm:$0xff] %v900
    %909 = vst [vmem:[#allocation2 + $0x358] sm:$0xff] %v901
    %910 = vst [vmem:[#allocation2 + $0x360] sm:$0xff] %v902
    %911 = vst [vmem:[#allocation2 + $0x368] sm:$0xff] %v903
    %912 = vst [vmem:[#allocation2 + $0x370] sm:$0xff] %v904
    %913 = vst [vmem:[#allocation2 + $0x378] sm:$0xff] %v905
    %914 = vrot.lane.b32.xlu0 %v34, 126
    %v915 = vpop.permute.xlu0 %914
    %916 = vrot.lane.b32.xlu0 %v38, 126
    %v917 = vpop.permute.xlu0 %916
    %918 = vrot.lane.b32.xlu0 %v35, 126
    %v919 = vpop.permute.xlu0 %918
    %920 = vrot.lane.b32.xlu0 %v39, 126
    %v921 = vpop.permute.xlu0 %920
    %922 = vrot.lane.b32.xlu0 %v36, 126
    %v923 = vpop.permute.xlu0 %922
    %924 = vrot.lane.b32.xlu0 %v40, 126
    %v925 = vpop.permute.xlu0 %924
    %926 = vrot.lane.b32.xlu0 %v37, 126
    %v927 = vpop.permute.xlu0 %926
    %928 = vrot.lane.b32.xlu0 %v41, 126
    %v929 = vpop.permute.xlu0 %928
    %vm930 = vcmp.lt.s32.totalorder %v59, 126
    %v931 = vsel %vm930, %v923, %v927
    %v932 = vsel %vm930, %v925, %v929
    %v933 = vsel %vm930, %v919, %v923
    %v934 = vsel %vm930, %v921, %v925
    %v935 = vsel %vm930, %v915, %v919
    %v936 = vsel %vm930, %v917, %v921
    %v937 = vsel %vm930, %v927, %v915
    %v938 = vsel %vm930, %v929, %v917
    %s939 = scalar_lea.vmem %s1, 56
    %v940 = vld [vmem:[%s939] sm:$0xf]
    %v942 = vlaneseq
    %v943 = vshrl.u32 %v942, 7
    %v944 = vsub.s32 0, %v943
    %v945 = vrot.slane %v940, %v944
    %v946 = vlaneseq
    %v947 = vshrl.u32 %v946, 7
    %v948 = vsub.s32 1, %v947
    %v949 = vrot.slane %v940, %v948
    %v950 = vlaneseq
    %v951 = vshrl.u32 %v950, 7
    %v952 = vsub.s32 2, %v951
    %v953 = vrot.slane %v940, %v952
    %v954 = vlaneseq
    %v955 = vshrl.u32 %v954, 7
    %v956 = vsub.s32 3, %v955
    %v957 = vrot.slane %v940, %v956
    %v962 = vmul.f32 %v935, %v945
    %v963 = vmul.f32 %v933, %v949
    %v964 = vmul.f32 %v931, %v953
    %v965 = vmul.f32 %v937, %v957
    %v966 = vmul.f32 %v936, %v945
    %v967 = vmul.f32 %v934, %v949
    %v968 = vmul.f32 %v932, %v953
    %v969 = vmul.f32 %v938, %v957
    %970 = vst [vmem:[#allocation2 + $0x380] sm:$0xff] %v962
    %971 = vst [vmem:[#allocation2 + $0x388] sm:$0xff] %v963
    %972 = vst [vmem:[#allocation2 + $0x390] sm:$0xff] %v964
    %973 = vst [vmem:[#allocation2 + $0x398] sm:$0xff] %v965
    %974 = vst [vmem:[#allocation2 + $0x3a0] sm:$0xff] %v966
    %975 = vst [vmem:[#allocation2 + $0x3a8] sm:$0xff] %v967
    %976 = vst [vmem:[#allocation2 + $0x3b0] sm:$0xff] %v968
    %977 = vst [vmem:[#allocation2 + $0x3b8] sm:$0xff] %v969
    %978 = vrot.lane.b32.xlu0 %v34, 114
    %v979 = vpop.permute.xlu0 %978
    %980 = vrot.lane.b32.xlu0 %v38, 114
    %v981 = vpop.permute.xlu0 %980
    %982 = vrot.lane.b32.xlu0 %v35, 114
    %v983 = vpop.permute.xlu0 %982
    %984 = vrot.lane.b32.xlu0 %v39, 114
    %v985 = vpop.permute.xlu0 %984
    %986 = vrot.lane.b32.xlu0 %v36, 114
    %v987 = vpop.permute.xlu0 %986
    %988 = vrot.lane.b32.xlu0 %v40, 114
    %v989 = vpop.permute.xlu0 %988
    %990 = vrot.lane.b32.xlu0 %v37, 114
    %v991 = vpop.permute.xlu0 %990
    %992 = vrot.lane.b32.xlu0 %v41, 114
    %v993 = vpop.permute.xlu0 %992
    %vm994 = vcmp.lt.s32.totalorder %v59, 114
    %v995 = vsel %vm994, %v987, %v991
    %v996 = vsel %vm994, %v989, %v993
    %v997 = vsel %vm994, %v983, %v987
    %v998 = vsel %vm994, %v985, %v989
    %v999 = vsel %vm994, %v979, %v983
    %v1000 = vsel %vm994, %v981, %v985
    %v1001 = vsel %vm994, %v991, %v979
    %v1002 = vsel %vm994, %v993, %v981
    %s1003 = scalar_lea.vmem %s1, 60
    %v1004 = vld [vmem:[%s1003] sm:$0xf]
    %v1006 = vlaneseq
    %v1007 = vshrl.u32 %v1006, 7
    %v1008 = vsub.s32 0, %v1007
    %v1009 = vrot.slane %v1004, %v1008
    %v1010 = vlaneseq
    %v1011 = vshrl.u32 %v1010, 7
    %v1012 = vsub.s32 1, %v1011
    %v1013 = vrot.slane %v1004, %v1012
    %v1014 = vlaneseq
    %v1015 = vshrl.u32 %v1014, 7
    %v1016 = vsub.s32 2, %v1015
    %v1017 = vrot.slane %v1004, %v1016
    %v1018 = vlaneseq
    %v1019 = vshrl.u32 %v1018, 7
    %v1020 = vsub.s32 3, %v1019
    %v1021 = vrot.slane %v1004, %v1020
    %v1026 = vmul.f32 %v999, %v1009
    %v1027 = vmul.f32 %v997, %v1013
    %v1028 = vmul.f32 %v995, %v1017
    %v1029 = vmul.f32 %v1001, %v1021
    %v1030 = vmul.f32 %v1000, %v1009
    %v1031 = vmul.f32 %v998, %v1013
    %v1032 = vmul.f32 %v996, %v1017
    %v1033 = vmul.f32 %v1002, %v1021
    %1034 = vst [vmem:[#allocation2 + $0x3c0] sm:$0xff] %v1026
    %1035 = vst [vmem:[#allocation2 + $0x3c8] sm:$0xff] %v1027
    %1036 = vst [vmem:[#allocation2 + $0x3d0] sm:$0xff] %v1028
    %1037 = vst [vmem:[#allocation2 + $0x3d8] sm:$0xff] %v1029
    %1038 = vst [vmem:[#allocation2 + $0x3e0] sm:$0xff] %v1030
    %1039 = vst [vmem:[#allocation2 + $0x3e8] sm:$0xff] %v1031
    %1040 = vst [vmem:[#allocation2 + $0x3f0] sm:$0xff] %v1032
    %1041 = vst [vmem:[#allocation2 + $0x3f8] sm:$0xff] %v1033
    %1042 = vrot.lane.b32.xlu0 %v34, 113
    %v1043 = vpop.permute.xlu0 %1042
    %1044 = vrot.lane.b32.xlu0 %v38, 113
    %v1045 = vpop.permute.xlu0 %1044
    %1046 = vrot.lane.b32.xlu0 %v35, 113
    %v1047 = vpop.permute.xlu0 %1046
    %1048 = vrot.lane.b32.xlu0 %v39, 113
    %v1049 = vpop.permute.xlu0 %1048
    %1050 = vrot.lane.b32.xlu0 %v36, 113
    %v1051 = vpop.permute.xlu0 %1050
    %1052 = vrot.lane.b32.xlu0 %v40, 113
    %v1053 = vpop.permute.xlu0 %1052
    %1054 = vrot.lane.b32.xlu0 %v37, 113
    %v1055 = vpop.permute.xlu0 %1054
    %1056 = vrot.lane.b32.xlu0 %v41, 113
    %v1057 = vpop.permute.xlu0 %1056
    %vm1058 = vcmp.lt.s32.totalorder %v59, 113
    %v1059 = vsel %vm1058, %v1051, %v1055
    %v1060 = vsel %vm1058, %v1053, %v1057
    %v1061 = vsel %vm1058, %v1047, %v1051
    %v1062 = vsel %vm1058, %v1049, %v1053
    %v1063 = vsel %vm1058, %v1043, %v1047
    %v1064 = vsel %vm1058, %v1045, %v1049
    %v1065 = vsel %vm1058, %v1055, %v1043
    %v1066 = vsel %vm1058, %v1057, %v1045
    %s1067 = scalar_lea.vmem %s1, 64
    %v1068 = vld [vmem:[%s1067] sm:$0xf]
    %v1070 = vlaneseq
    %v1071 = vshrl.u32 %v1070, 7
    %v1072 = vsub.s32 0, %v1071
    %v1073 = vrot.slane %v1068, %v1072
    %v1074 = vlaneseq
    %v1075 = vshrl.u32 %v1074, 7
    %v1076 = vsub.s32 1, %v1075
    %v1077 = vrot.slane %v1068, %v1076
    %v1078 = vlaneseq
    %v1079 = vshrl.u32 %v1078, 7
    %v1080 = vsub.s32 2, %v1079
    %v1081 = vrot.slane %v1068, %v1080
    %v1082 = vlaneseq
    %v1083 = vshrl.u32 %v1082, 7
    %v1084 = vsub.s32 3, %v1083
    %v1085 = vrot.slane %v1068, %v1084
    %v1090 = vmul.f32 %v1063, %v1073
    %v1091 = vmul.f32 %v1061, %v1077
    %v1092 = vmul.f32 %v1059, %v1081
    %v1093 = vmul.f32 %v1065, %v1085
    %v1094 = vmul.f32 %v1064, %v1073
    %v1095 = vmul.f32 %v1062, %v1077
    %v1096 = vmul.f32 %v1060, %v1081
    %v1097 = vmul.f32 %v1066, %v1085
    %1098 = vst [vmem:[#allocation2 + $0x400] sm:$0xff] %v1090
    %1099 = vst [vmem:[#allocation2 + $0x408] sm:$0xff] %v1091
    %1100 = vst [vmem:[#allocation2 + $0x410] sm:$0xff] %v1092
    %1101 = vst [vmem:[#allocation2 + $0x418] sm:$0xff] %v1093
    %1102 = vst [vmem:[#allocation2 + $0x420] sm:$0xff] %v1094
    %1103 = vst [vmem:[#allocation2 + $0x428] sm:$0xff] %v1095
    %1104 = vst [vmem:[#allocation2 + $0x430] sm:$0xff] %v1096
    %1105 = vst [vmem:[#allocation2 + $0x438] sm:$0xff] %v1097
    %1106 = vrot.lane.b32.xlu0 %v34, 112
    %v1107 = vpop.permute.xlu0 %1106
    %1108 = vrot.lane.b32.xlu0 %v38, 112
    %v1109 = vpop.permute.xlu0 %1108
    %1110 = vrot.lane.b32.xlu0 %v35, 112
    %v1111 = vpop.permute.xlu0 %1110
    %1112 = vrot.lane.b32.xlu0 %v39, 112
    %v1113 = vpop.permute.xlu0 %1112
    %1114 = vrot.lane.b32.xlu0 %v36, 112
    %v1115 = vpop.permute.xlu0 %1114
    %1116 = vrot.lane.b32.xlu0 %v40, 112
    %v1117 = vpop.permute.xlu0 %1116
    %1118 = vrot.lane.b32.xlu0 %v37, 112
    %v1119 = vpop.permute.xlu0 %1118
    %1120 = vrot.lane.b32.xlu0 %v41, 112
    %v1121 = vpop.permute.xlu0 %1120
    %vm1122 = vcmp.lt.s32.totalorder %v59, 112
    %v1123 = vsel %vm1122, %v1115, %v1119
    %v1124 = vsel %vm1122, %v1117, %v1121
    %v1125 = vsel %vm1122, %v1111, %v1115
    %v1126 = vsel %vm1122, %v1113, %v1117
    %v1127 = vsel %vm1122, %v1107, %v1111
    %v1128 = vsel %vm1122, %v1109, %v1113
    %v1129 = vsel %vm1122, %v1119, %v1107
    %v1130 = vsel %vm1122, %v1121, %v1109
    %s1131 = scalar_lea.vmem %s1, 68
    %v1132 = vld [vmem:[%s1131] sm:$0xf]
    %v1134 = vlaneseq
    %v1135 = vshrl.u32 %v1134, 7
    %v1136 = vsub.s32 0, %v1135
    %v1137 = vrot.slane %v1132, %v1136
    %v1138 = vlaneseq
    %v1139 = vshrl.u32 %v1138, 7
    %v1140 = vsub.s32 1, %v1139
    %v1141 = vrot.slane %v1132, %v1140
    %v1142 = vlaneseq
    %v1143 = vshrl.u32 %v1142, 7
    %v1144 = vsub.s32 2, %v1143
    %v1145 = vrot.slane %v1132, %v1144
    %v1146 = vlaneseq
    %v1147 = vshrl.u32 %v1146, 7
    %v1148 = vsub.s32 3, %v1147
    %v1149 = vrot.slane %v1132, %v1148
    %v1154 = vmul.f32 %v1127, %v1137
    %v1155 = vmul.f32 %v1125, %v1141
    %v1156 = vmul.f32 %v1123, %v1145
    %v1157 = vmul.f32 %v1129, %v1149
    %v1158 = vmul.f32 %v1128, %v1137
    %v1159 = vmul.f32 %v1126, %v1141
    %v1160 = vmul.f32 %v1124, %v1145
    %v1161 = vmul.f32 %v1130, %v1149
    %1162 = vst [vmem:[#allocation2 + $0x440] sm:$0xff] %v1154
    %1163 = vst [vmem:[#allocation2 + $0x448] sm:$0xff] %v1155
    %1164 = vst [vmem:[#allocation2 + $0x450] sm:$0xff] %v1156
    %1165 = vst [vmem:[#allocation2 + $0x458] sm:$0xff] %v1157
    %1166 = vst [vmem:[#allocation2 + $0x460] sm:$0xff] %v1158
    %1167 = vst [vmem:[#allocation2 + $0x468] sm:$0xff] %v1159
    %1168 = vst [vmem:[#allocation2 + $0x470] sm:$0xff] %v1160
    %1169 = vst [vmem:[#allocation2 + $0x478] sm:$0xff] %v1161
    %1170 = vrot.lane.b32.xlu0 %v34, 111
    %v1171 = vpop.permute.xlu0 %1170
    %1172 = vrot.lane.b32.xlu0 %v38, 111
    %v1173 = vpop.permute.xlu0 %1172
    %1174 = vrot.lane.b32.xlu0 %v35, 111
    %v1175 = vpop.permute.xlu0 %1174
    %1176 = vrot.lane.b32.xlu0 %v39, 111
    %v1177 = vpop.permute.xlu0 %1176
    %1178 = vrot.lane.b32.xlu0 %v36, 111
    %v1179 = vpop.permute.xlu0 %1178
    %1180 = vrot.lane.b32.xlu0 %v40, 111
    %v1181 = vpop.permute.xlu0 %1180
    %1182 = vrot.lane.b32.xlu0 %v37, 111
    %v1183 = vpop.permute.xlu0 %1182
    %1184 = vrot.lane.b32.xlu0 %v41, 111
    %v1185 = vpop.permute.xlu0 %1184
    %vm1186 = vcmp.lt.s32.totalorder %v59, 111
    %v1187 = vsel %vm1186, %v1179, %v1183
    %v1188 = vsel %vm1186, %v1181, %v1185
    %v1189 = vsel %vm1186, %v1175, %v1179
    %v1190 = vsel %vm1186, %v1177, %v1181
    %v1191 = vsel %vm1186, %v1171, %v1175
    %v1192 = vsel %vm1186, %v1173, %v1177
    %v1193 = vsel %vm1186, %v1183, %v1171
    %v1194 = vsel %vm1186, %v1185, %v1173
    %s1195 = scalar_lea.vmem %s1, 72
    %v1196 = vld [vmem:[%s1195] sm:$0xf]
    %v1198 = vlaneseq
    %v1199 = vshrl.u32 %v1198, 7
    %v1200 = vsub.s32 0, %v1199
    %v1201 = vrot.slane %v1196, %v1200
    %v1202 = vlaneseq
    %v1203 = vshrl.u32 %v1202, 7
    %v1204 = vsub.s32 1, %v1203
    %v1205 = vrot.slane %v1196, %v1204
    %v1206 = vlaneseq
    %v1207 = vshrl.u32 %v1206, 7
    %v1208 = vsub.s32 2, %v1207
    %v1209 = vrot.slane %v1196, %v1208
    %v1210 = vlaneseq
    %v1211 = vshrl.u32 %v1210, 7
    %v1212 = vsub.s32 3, %v1211
    %v1213 = vrot.slane %v1196, %v1212
    %v1218 = vmul.f32 %v1191, %v1201
    %v1219 = vmul.f32 %v1189, %v1205
    %v1220 = vmul.f32 %v1187, %v1209
    %v1221 = vmul.f32 %v1193, %v1213
    %v1222 = vmul.f32 %v1192, %v1201
    %v1223 = vmul.f32 %v1190, %v1205
    %v1224 = vmul.f32 %v1188, %v1209
    %v1225 = vmul.f32 %v1194, %v1213
    %1226 = vst [vmem:[#allocation2 + $0x480] sm:$0xff] %v1218
    %1227 = vst [vmem:[#allocation2 + $0x488] sm:$0xff] %v1219
    %1228 = vst [vmem:[#allocation2 + $0x490] sm:$0xff] %v1220
    %1229 = vst [vmem:[#allocation2 + $0x498] sm:$0xff] %v1221
    %1230 = vst [vmem:[#allocation2 + $0x4a0] sm:$0xff] %v1222
    %1231 = vst [vmem:[#allocation2 + $0x4a8] sm:$0xff] %v1223
    %1232 = vst [vmem:[#allocation2 + $0x4b0] sm:$0xff] %v1224
    %1233 = vst [vmem:[#allocation2 + $0x4b8] sm:$0xff] %v1225
    %1234 = vrot.lane.b32.xlu0 %v34, 110
    %v1235 = vpop.permute.xlu0 %1234
    %1236 = vrot.lane.b32.xlu0 %v38, 110
    %v1237 = vpop.permute.xlu0 %1236
    %1238 = vrot.lane.b32.xlu0 %v35, 110
    %v1239 = vpop.permute.xlu0 %1238
    %1240 = vrot.lane.b32.xlu0 %v39, 110
    %v1241 = vpop.permute.xlu0 %1240
    %1242 = vrot.lane.b32.xlu0 %v36, 110
    %v1243 = vpop.permute.xlu0 %1242
    %1244 = vrot.lane.b32.xlu0 %v40, 110
    %v1245 = vpop.permute.xlu0 %1244
    %1246 = vrot.lane.b32.xlu0 %v37, 110
    %v1247 = vpop.permute.xlu0 %1246
    %1248 = vrot.lane.b32.xlu0 %v41, 110
    %v1249 = vpop.permute.xlu0 %1248
    %vm1250 = vcmp.lt.s32.totalorder %v59, 110
    %v1251 = vsel %vm1250, %v1243, %v1247
    %v1252 = vsel %vm1250, %v1245, %v1249
    %v1253 = vsel %vm1250, %v1239, %v1243
    %v1254 = vsel %vm1250, %v1241, %v1245
    %v1255 = vsel %vm1250, %v1235, %v1239
    %v1256 = vsel %vm1250, %v1237, %v1241
    %v1257 = vsel %vm1250, %v1247, %v1235
    %v1258 = vsel %vm1250, %v1249, %v1237
    %s1259 = scalar_lea.vmem %s1, 76
    %v1260 = vld [vmem:[%s1259] sm:$0xf]
    %v1262 = vlaneseq
    %v1263 = vshrl.u32 %v1262, 7
    %v1264 = vsub.s32 0, %v1263
    %v1265 = vrot.slane %v1260, %v1264
    %v1266 = vlaneseq
    %v1267 = vshrl.u32 %v1266, 7
    %v1268 = vsub.s32 1, %v1267
    %v1269 = vrot.slane %v1260, %v1268
    %v1270 = vlaneseq
    %v1271 = vshrl.u32 %v1270, 7
    %v1272 = vsub.s32 2, %v1271
    %v1273 = vrot.slane %v1260, %v1272
    %v1274 = vlaneseq
    %v1275 = vshrl.u32 %v1274, 7
    %v1276 = vsub.s32 3, %v1275
    %v1277 = vrot.slane %v1260, %v1276
    %v1282 = vmul.f32 %v1255, %v1265
    %v1283 = vmul.f32 %v1253, %v1269
    %v1284 = vmul.f32 %v1251, %v1273
    %v1285 = vmul.f32 %v1257, %v1277
    %v1286 = vmul.f32 %v1256, %v1265
    %v1287 = vmul.f32 %v1254, %v1269
    %v1288 = vmul.f32 %v1252, %v1273
    %v1289 = vmul.f32 %v1258, %v1277
    %1290 = vst [vmem:[#allocation2 + $0x4c0] sm:$0xff] %v1282
    %1291 = vst [vmem:[#allocation2 + $0x4c8] sm:$0xff] %v1283
    %1292 = vst [vmem:[#allocation2 + $0x4d0] sm:$0xff] %v1284
    %1293 = vst [vmem:[#allocation2 + $0x4d8] sm:$0xff] %v1285
    %1294 = vst [vmem:[#allocation2 + $0x4e0] sm:$0xff] %v1286
    %1295 = vst [vmem:[#allocation2 + $0x4e8] sm:$0xff] %v1287
    %1296 = vst [vmem:[#allocation2 + $0x4f0] sm:$0xff] %v1288
    %1297 = vst [vmem:[#allocation2 + $0x4f8] sm:$0xff] %v1289
    %1298 = vrot.lane.b32.xlu0 %v34, 98
    %v1299 = vpop.permute.xlu0 %1298
    %1300 = vrot.lane.b32.xlu0 %v38, 98
    %v1301 = vpop.permute.xlu0 %1300
    %1302 = vrot.lane.b32.xlu0 %v35, 98
    %v1303 = vpop.permute.xlu0 %1302
    %1304 = vrot.lane.b32.xlu0 %v39, 98
    %v1305 = vpop.permute.xlu0 %1304
    %1306 = vrot.lane.b32.xlu0 %v36, 98
    %v1307 = vpop.permute.xlu0 %1306
    %1308 = vrot.lane.b32.xlu0 %v40, 98
    %v1309 = vpop.permute.xlu0 %1308
    %1310 = vrot.lane.b32.xlu0 %v37, 98
    %v1311 = vpop.permute.xlu0 %1310
    %1312 = vrot.lane.b32.xlu0 %v41, 98
    %v1313 = vpop.permute.xlu0 %1312
    %vm1314 = vcmp.lt.s32.totalorder %v59, 98
    %v1315 = vsel %vm1314, %v1307, %v1311
    %v1316 = vsel %vm1314, %v1309, %v1313
    %v1317 = vsel %vm1314, %v1303, %v1307
    %v1318 = vsel %vm1314, %v1305, %v1309
    %v1319 = vsel %vm1314, %v1299, %v1303
    %v1320 = vsel %vm1314, %v1301, %v1305
    %v1321 = vsel %vm1314, %v1311, %v1299
    %v1322 = vsel %vm1314, %v1313, %v1301
    %s1323 = scalar_lea.vmem %s1, 80
    %v1324 = vld [vmem:[%s1323] sm:$0xf]
    %v1326 = vlaneseq
    %v1327 = vshrl.u32 %v1326, 7
    %v1328 = vsub.s32 0, %v1327
    %v1329 = vrot.slane %v1324, %v1328
    %v1330 = vlaneseq
    %v1331 = vshrl.u32 %v1330, 7
    %v1332 = vsub.s32 1, %v1331
    %v1333 = vrot.slane %v1324, %v1332
    %v1334 = vlaneseq
    %v1335 = vshrl.u32 %v1334, 7
    %v1336 = vsub.s32 2, %v1335
    %v1337 = vrot.slane %v1324, %v1336
    %v1338 = vlaneseq
    %v1339 = vshrl.u32 %v1338, 7
    %v1340 = vsub.s32 3, %v1339
    %v1341 = vrot.slane %v1324, %v1340
    %v1346 = vmul.f32 %v1319, %v1329
    %v1347 = vmul.f32 %v1317, %v1333
    %v1348 = vmul.f32 %v1315, %v1337
    %v1349 = vmul.f32 %v1321, %v1341
    %v1350 = vmul.f32 %v1320, %v1329
    %v1351 = vmul.f32 %v1318, %v1333
    %v1352 = vmul.f32 %v1316, %v1337
    %v1353 = vmul.f32 %v1322, %v1341
    %1354 = vst [vmem:[#allocation2 + $0x500] sm:$0xff] %v1346
    %1355 = vst [vmem:[#allocation2 + $0x508] sm:$0xff] %v1347
    %1356 = vst [vmem:[#allocation2 + $0x510] sm:$0xff] %v1348
    %1357 = vst [vmem:[#allocation2 + $0x518] sm:$0xff] %v1349
    %1358 = vst [vmem:[#allocation2 + $0x520] sm:$0xff] %v1350
    %1359 = vst [vmem:[#allocation2 + $0x528] sm:$0xff] %v1351
    %1360 = vst [vmem:[#allocation2 + $0x530] sm:$0xff] %v1352
    %1361 = vst [vmem:[#allocation2 + $0x538] sm:$0xff] %v1353
    %1362 = vrot.lane.b32.xlu0 %v34, 97
    %v1363 = vpop.permute.xlu0 %1362
    %1364 = vrot.lane.b32.xlu0 %v38, 97
    %v1365 = vpop.permute.xlu0 %1364
    %1366 = vrot.lane.b32.xlu0 %v35, 97
    %v1367 = vpop.permute.xlu0 %1366
    %1368 = vrot.lane.b32.xlu0 %v39, 97
    %v1369 = vpop.permute.xlu0 %1368
    %1370 = vrot.lane.b32.xlu0 %v36, 97
    %v1371 = vpop.permute.xlu0 %1370
    %1372 = vrot.lane.b32.xlu0 %v40, 97
    %v1373 = vpop.permute.xlu0 %1372
    %1374 = vrot.lane.b32.xlu0 %v37, 97
    %v1375 = vpop.permute.xlu0 %1374
    %1376 = vrot.lane.b32.xlu0 %v41, 97
    %v1377 = vpop.permute.xlu0 %1376
    %vm1378 = vcmp.lt.s32.totalorder %v59, 97
    %v1379 = vsel %vm1378, %v1371, %v1375
    %v1380 = vsel %vm1378, %v1373, %v1377
    %v1381 = vsel %vm1378, %v1367, %v1371
    %v1382 = vsel %vm1378, %v1369, %v1373
    %v1383 = vsel %vm1378, %v1363, %v1367
    %v1384 = vsel %vm1378, %v1365, %v1369
    %v1385 = vsel %vm1378, %v1375, %v1363
    %v1386 = vsel %vm1378, %v1377, %v1365
    %s1387 = scalar_lea.vmem %s1, 84
    %v1388 = vld [vmem:[%s1387] sm:$0xf]
    %v1390 = vlaneseq
    %v1391 = vshrl.u32 %v1390, 7
    %v1392 = vsub.s32 0, %v1391
    %v1393 = vrot.slane %v1388, %v1392
    %v1394 = vlaneseq
    %v1395 = vshrl.u32 %v1394, 7
    %v1396 = vsub.s32 1, %v1395
    %v1397 = vrot.slane %v1388, %v1396
    %v1398 = vlaneseq
    %v1399 = vshrl.u32 %v1398, 7
    %v1400 = vsub.s32 2, %v1399
    %v1401 = vrot.slane %v1388, %v1400
    %v1402 = vlaneseq
    %v1403 = vshrl.u32 %v1402, 7
    %v1404 = vsub.s32 3, %v1403
    %v1405 = vrot.slane %v1388, %v1404
    %v1410 = vmul.f32 %v1383, %v1393
    %v1411 = vmul.f32 %v1381, %v1397
    %v1412 = vmul.f32 %v1379, %v1401
    %v1413 = vmul.f32 %v1385, %v1405
    %v1414 = vmul.f32 %v1384, %v1393
    %v1415 = vmul.f32 %v1382, %v1397
    %v1416 = vmul.f32 %v1380, %v1401
    %v1417 = vmul.f32 %v1386, %v1405
    %1418 = vst [vmem:[#allocation2 + $0x540] sm:$0xff] %v1410
    %1419 = vst [vmem:[#allocation2 + $0x548] sm:$0xff] %v1411
    %1420 = vst [vmem:[#allocation2 + $0x550] sm:$0xff] %v1412
    %1421 = vst [vmem:[#allocation2 + $0x558] sm:$0xff] %v1413
    %1422 = vst [vmem:[#allocation2 + $0x560] sm:$0xff] %v1414
    %1423 = vst [vmem:[#allocation2 + $0x568] sm:$0xff] %v1415
    %1424 = vst [vmem:[#allocation2 + $0x570] sm:$0xff] %v1416
    %1425 = vst [vmem:[#allocation2 + $0x578] sm:$0xff] %v1417
    %1426 = vrot.lane.b32.xlu0 %v34, 96
    %v1427 = vpop.permute.xlu0 %1426
    %1428 = vrot.lane.b32.xlu0 %v38, 96
    %v1429 = vpop.permute.xlu0 %1428
    %1430 = vrot.lane.b32.xlu0 %v35, 96
    %v1431 = vpop.permute.xlu0 %1430
    %1432 = vrot.lane.b32.xlu0 %v39, 96
    %v1433 = vpop.permute.xlu0 %1432
    %1434 = vrot.lane.b32.xlu0 %v36, 96
    %v1435 = vpop.permute.xlu0 %1434
    %1436 = vrot.lane.b32.xlu0 %v40, 96
    %v1437 = vpop.permute.xlu0 %1436
    %1438 = vrot.lane.b32.xlu0 %v37, 96
    %v1439 = vpop.permute.xlu0 %1438
    %1440 = vrot.lane.b32.xlu0 %v41, 96
    %v1441 = vpop.permute.xlu0 %1440
    %vm1442 = vcmp.lt.s32.totalorder %v59, 96
    %v1443 = vsel %vm1442, %v1435, %v1439
    %v1444 = vsel %vm1442, %v1437, %v1441
    %v1445 = vsel %vm1442, %v1431, %v1435
    %v1446 = vsel %vm1442, %v1433, %v1437
    %v1447 = vsel %vm1442, %v1427, %v1431
    %v1448 = vsel %vm1442, %v1429, %v1433
    %v1449 = vsel %vm1442, %v1439, %v1427
    %v1450 = vsel %vm1442, %v1441, %v1429
    %s1451 = scalar_lea.vmem %s1, 88
    %v1452 = vld [vmem:[%s1451] sm:$0xf]
    %v1454 = vlaneseq
    %v1455 = vshrl.u32 %v1454, 7
    %v1456 = vsub.s32 0, %v1455
    %v1457 = vrot.slane %v1452, %v1456
    %v1458 = vlaneseq
    %v1459 = vshrl.u32 %v1458, 7
    %v1460 = vsub.s32 1, %v1459
    %v1461 = vrot.slane %v1452, %v1460
    %v1462 = vlaneseq
    %v1463 = vshrl.u32 %v1462, 7
    %v1464 = vsub.s32 2, %v1463
    %v1465 = vrot.slane %v1452, %v1464
    %v1466 = vlaneseq
    %v1467 = vshrl.u32 %v1466, 7
    %v1468 = vsub.s32 3, %v1467
    %v1469 = vrot.slane %v1452, %v1468
    %v1474 = vmul.f32 %v1447, %v1457
    %v1475 = vmul.f32 %v1445, %v1461
    %v1476 = vmul.f32 %v1443, %v1465
    %v1477 = vmul.f32 %v1449, %v1469
    %v1478 = vmul.f32 %v1448, %v1457
    %v1479 = vmul.f32 %v1446, %v1461
    %v1480 = vmul.f32 %v1444, %v1465
    %v1481 = vmul.f32 %v1450, %v1469
    %1482 = vst [vmem:[#allocation2 + $0x580] sm:$0xff] %v1474
    %1483 = vst [vmem:[#allocation2 + $0x588] sm:$0xff] %v1475
    %1484 = vst [vmem:[#allocation2 + $0x590] sm:$0xff] %v1476
    %1485 = vst [vmem:[#allocation2 + $0x598] sm:$0xff] %v1477
    %1486 = vst [vmem:[#allocation2 + $0x5a0] sm:$0xff] %v1478
    %1487 = vst [vmem:[#allocation2 + $0x5a8] sm:$0xff] %v1479
    %1488 = vst [vmem:[#allocation2 + $0x5b0] sm:$0xff] %v1480
    %1489 = vst [vmem:[#allocation2 + $0x5b8] sm:$0xff] %v1481
    %1490 = vrot.lane.b32.xlu0 %v34, 95
    %v1491 = vpop.permute.xlu0 %1490
    %1492 = vrot.lane.b32.xlu0 %v38, 95
    %v1493 = vpop.permute.xlu0 %1492
    %1494 = vrot.lane.b32.xlu0 %v35, 95
    %v1495 = vpop.permute.xlu0 %1494
    %1496 = vrot.lane.b32.xlu0 %v39, 95
    %v1497 = vpop.permute.xlu0 %1496
    %1498 = vrot.lane.b32.xlu0 %v36, 95
    %v1499 = vpop.permute.xlu0 %1498
    %1500 = vrot.lane.b32.xlu0 %v40, 95
    %v1501 = vpop.permute.xlu0 %1500
    %1502 = vrot.lane.b32.xlu0 %v37, 95
    %v1503 = vpop.permute.xlu0 %1502
    %1504 = vrot.lane.b32.xlu0 %v41, 95
    %v1505 = vpop.permute.xlu0 %1504
    %vm1506 = vcmp.lt.s32.totalorder %v59, 95
    %v1507 = vsel %vm1506, %v1499, %v1503
    %v1508 = vsel %vm1506, %v1501, %v1505
    %v1509 = vsel %vm1506, %v1495, %v1499
    %v1510 = vsel %vm1506, %v1497, %v1501
    %v1511 = vsel %vm1506, %v1491, %v1495
    %v1512 = vsel %vm1506, %v1493, %v1497
    %v1513 = vsel %vm1506, %v1503, %v1491
    %v1514 = vsel %vm1506, %v1505, %v1493
    %s1515 = scalar_lea.vmem %s1, 92
    %v1516 = vld [vmem:[%s1515] sm:$0xf]
    %v1518 = vlaneseq
    %v1519 = vshrl.u32 %v1518, 7
    %v1520 = vsub.s32 0, %v1519
    %v1521 = vrot.slane %v1516, %v1520
    %v1522 = vlaneseq
    %v1523 = vshrl.u32 %v1522, 7
    %v1524 = vsub.s32 1, %v1523
    %v1525 = vrot.slane %v1516, %v1524
    %v1526 = vlaneseq
    %v1527 = vshrl.u32 %v1526, 7
    %v1528 = vsub.s32 2, %v1527
    %v1529 = vrot.slane %v1516, %v1528
    %v1530 = vlaneseq
    %v1531 = vshrl.u32 %v1530, 7
    %v1532 = vsub.s32 3, %v1531
    %v1533 = vrot.slane %v1516, %v1532
    %v1538 = vmul.f32 %v1511, %v1521
    %v1539 = vmul.f32 %v1509, %v1525
    %v1540 = vmul.f32 %v1507, %v1529
    %v1541 = vmul.f32 %v1513, %v1533
    %v1542 = vmul.f32 %v1512, %v1521
    %v1543 = vmul.f32 %v1510, %v1525
    %v1544 = vmul.f32 %v1508, %v1529
    %v1545 = vmul.f32 %v1514, %v1533
    %1546 = vst [vmem:[#allocation2 + $0x5c0] sm:$0xff] %v1538
    %1547 = vst [vmem:[#allocation2 + $0x5c8] sm:$0xff] %v1539
    %1548 = vst [vmem:[#allocation2 + $0x5d0] sm:$0xff] %v1540
    %1549 = vst [vmem:[#allocation2 + $0x5d8] sm:$0xff] %v1541
    %1550 = vst [vmem:[#allocation2 + $0x5e0] sm:$0xff] %v1542
    %1551 = vst [vmem:[#allocation2 + $0x5e8] sm:$0xff] %v1543
    %1552 = vst [vmem:[#allocation2 + $0x5f0] sm:$0xff] %v1544
    %1553 = vst [vmem:[#allocation2 + $0x5f8] sm:$0xff] %v1545
    %1554 = vrot.lane.b32.xlu0 %v34, 94
    %v1555 = vpop.permute.xlu0 %1554
    %1556 = vrot.lane.b32.xlu0 %v38, 94
    %v1557 = vpop.permute.xlu0 %1556
    %1558 = vrot.lane.b32.xlu0 %v35, 94
    %v1559 = vpop.permute.xlu0 %1558
    %1560 = vrot.lane.b32.xlu0 %v39, 94
    %v1561 = vpop.permute.xlu0 %1560
    %1562 = vrot.lane.b32.xlu0 %v36, 94
    %v1563 = vpop.permute.xlu0 %1562
    %1564 = vrot.lane.b32.xlu0 %v40, 94
    %v1565 = vpop.permute.xlu0 %1564
    %1566 = vrot.lane.b32.xlu0 %v37, 94
    %v1567 = vpop.permute.xlu0 %1566
    %1568 = vrot.lane.b32.xlu0 %v41, 94
    %v1569 = vpop.permute.xlu0 %1568
    %vm1570 = vcmp.lt.s32.totalorder %v59, 94
    %v1571 = vsel %vm1570, %v1563, %v1567
    %v1572 = vsel %vm1570, %v1565, %v1569
    %v1573 = vsel %vm1570, %v1559, %v1563
    %v1574 = vsel %vm1570, %v1561, %v1565
    %v1575 = vsel %vm1570, %v1555, %v1559
    %v1576 = vsel %vm1570, %v1557, %v1561
    %v1577 = vsel %vm1570, %v1567, %v1555
    %v1578 = vsel %vm1570, %v1569, %v1557
    %s1579 = scalar_lea.vmem %s1, 96
    %v1580 = vld [vmem:[%s1579] sm:$0xf]
    %v1582 = vlaneseq
    %v1583 = vshrl.u32 %v1582, 7
    %v1584 = vsub.s32 0, %v1583
    %v1585 = vrot.slane %v1580, %v1584
    %v1586 = vlaneseq
    %v1587 = vshrl.u32 %v1586, 7
    %v1588 = vsub.s32 1, %v1587
    %v1589 = vrot.slane %v1580, %v1588
    %v1590 = vlaneseq
    %v1591 = vshrl.u32 %v1590, 7
    %v1592 = vsub.s32 2, %v1591
    %v1593 = vrot.slane %v1580, %v1592
    %v1594 = vlaneseq
    %v1595 = vshrl.u32 %v1594, 7
    %v1596 = vsub.s32 3, %v1595
    %v1597 = vrot.slane %v1580, %v1596
    %v1602 = vmul.f32 %v1575, %v1585
    %v1603 = vmul.f32 %v1573, %v1589
    %v1604 = vmul.f32 %v1571, %v1593
    %v1605 = vmul.f32 %v1577, %v1597
    %v1606 = vmul.f32 %v1576, %v1585
    %v1607 = vmul.f32 %v1574, %v1589
    %v1608 = vmul.f32 %v1572, %v1593
    %v1609 = vmul.f32 %v1578, %v1597
    %1610 = vst [vmem:[#allocation2 + $0x600] sm:$0xff] %v1602
    %1611 = vst [vmem:[#allocation2 + $0x608] sm:$0xff] %v1603
    %1612 = vst [vmem:[#allocation2 + $0x610] sm:$0xff] %v1604
    %1613 = vst [vmem:[#allocation2 + $0x618] sm:$0xff] %v1605
    %1614 = vst [vmem:[#allocation2 + $0x620] sm:$0xff] %v1606
    %1615 = vst [vmem:[#allocation2 + $0x628] sm:$0xff] %v1607
    %1616 = vst [vmem:[#allocation2 + $0x630] sm:$0xff] %v1608
    %1617 = vst [vmem:[#allocation2 + $0x638] sm:$0xff] %v1609
    %s1618 = smul.u32 %s29, 8
    %s1619 = smul.addr %s1618, 8
    %s1620 = scalar_lea.vmem %s2, %s1619
    %v1621 = vld [vmem:[%s1620] sm:$0xff]
    %v1622 = vld [vmem:[%s1620 + $0x8] sm:$0xff]
    %v1623 = vld [vmem:[%s1620 + $0x10] sm:$0xff]
    %v1624 = vld [vmem:[%s1620 + $0x18] sm:$0xff]
    %v1625 = vld [vmem:[%s1620 + $0x20] sm:$0xff]
    %v1626 = vld [vmem:[%s1620 + $0x28] sm:$0xff]
    %v1627 = vld [vmem:[%s1620 + $0x30] sm:$0xff]
    %v1628 = vld [vmem:[%s1620 + $0x38] sm:$0xff]
    %v1629 = vld [vmem:[#allocation2] sm:$0xff]
    %v1630 = vld [vmem:[#allocation2 + $0x8] sm:$0xff]
    %v1631 = vld [vmem:[#allocation2 + $0x10] sm:$0xff]
    %v1632 = vld [vmem:[#allocation2 + $0x18] sm:$0xff]
    %v1633 = vld [vmem:[#allocation2 + $0x20] sm:$0xff]
    %v1634 = vld [vmem:[#allocation2 + $0x28] sm:$0xff]
    %v1635 = vld [vmem:[#allocation2 + $0x30] sm:$0xff]
    %v1636 = vld [vmem:[#allocation2 + $0x38] sm:$0xff]
    %v1637 = vld [vmem:[#allocation2 + $0x40] sm:$0xff]
    %v1638 = vld [vmem:[#allocation2 + $0x48] sm:$0xff]
    %v1639 = vld [vmem:[#allocation2 + $0x50] sm:$0xff]
    %v1640 = vld [vmem:[#allocation2 + $0x58] sm:$0xff]
    %v1641 = vld [vmem:[#allocation2 + $0x60] sm:$0xff]
    %v1642 = vld [vmem:[#allocation2 + $0x68] sm:$0xff]
    %v1643 = vld [vmem:[#allocation2 + $0x70] sm:$0xff]
    %v1644 = vld [vmem:[#allocation2 + $0x78] sm:$0xff]
    %v1645 = vld [vmem:[#allocation2 + $0x80] sm:$0xff]
    %v1646 = vld [vmem:[#allocation2 + $0x88] sm:$0xff]
    %v1647 = vld [vmem:[#allocation2 + $0x90] sm:$0xff]
    %v1648 = vld [vmem:[#allocation2 + $0x98] sm:$0xff]
    %v1649 = vld [vmem:[#allocation2 + $0xa0] sm:$0xff]
    %v1650 = vld [vmem:[#allocation2 + $0xa8] sm:$0xff]
    %v1651 = vld [vmem:[#allocation2 + $0xb0] sm:$0xff]
    %v1652 = vld [vmem:[#allocation2 + $0xb8] sm:$0xff]
    %v1653 = vld [vmem:[#allocation2 + $0xc0] sm:$0xff]
    %v1654 = vld [vmem:[#allocation2 + $0xc8] sm:$0xff]
    %v1655 = vld [vmem:[#allocation2 + $0xd0] sm:$0xff]
    %v1656 = vld [vmem:[#allocation2 + $0xd8] sm:$0xff]
    %v1657 = vld [vmem:[#allocation2 + $0xe0] sm:$0xff]
    %v1658 = vld [vmem:[#allocation2 + $0xe8] sm:$0xff]
    %v1659 = vld [vmem:[#allocation2 + $0xf0] sm:$0xff]
    %v1660 = vld [vmem:[#allocation2 + $0xf8] sm:$0xff]
    %v1661 = vld [vmem:[#allocation2 + $0x100] sm:$0xff]
    %v1662 = vld [vmem:[#allocation2 + $0x108] sm:$0xff]
    %v1663 = vld [vmem:[#allocation2 + $0x110] sm:$0xff]
    %v1664 = vld [vmem:[#allocation2 + $0x118] sm:$0xff]
    %v1665 = vld [vmem:[#allocation2 + $0x120] sm:$0xff]
    %v1666 = vld [vmem:[#allocation2 + $0x128] sm:$0xff]
    %v1667 = vld [vmem:[#allocation2 + $0x130] sm:$0xff]
    %v1668 = vld [vmem:[#allocation2 + $0x138] sm:$0xff]
    %v1669 = vld [vmem:[#allocation2 + $0x140] sm:$0xff]
    %v1670 = vld [vmem:[#allocation2 + $0x148] sm:$0xff]
    %v1671 = vld [vmem:[#allocation2 + $0x150] sm:$0xff]
    %v1672 = vld [vmem:[#allocation2 + $0x158] sm:$0xff]
    %v1673 = vld [vmem:[#allocation2 + $0x160] sm:$0xff]
    %v1674 = vld [vmem:[#allocation2 + $0x168] sm:$0xff]
    %v1675 = vld [vmem:[#allocation2 + $0x170] sm:$0xff]
    %v1676 = vld [vmem:[#allocation2 + $0x178] sm:$0xff]
    %v1677 = vld [vmem:[#allocation2 + $0x180] sm:$0xff]
    %v1678 = vld [vmem:[#allocation2 + $0x188] sm:$0xff]
    %v1679 = vld [vmem:[#allocation2 + $0x190] sm:$0xff]
    %v1680 = vld [vmem:[#allocation2 + $0x198] sm:$0xff]
    %v1681 = vld [vmem:[#allocation2 + $0x1a0] sm:$0xff]
    %v1682 = vld [vmem:[#allocation2 + $0x1a8] sm:$0xff]
    %v1683 = vld [vmem:[#allocation2 + $0x1b0] sm:$0xff]
    %v1684 = vld [vmem:[#allocation2 + $0x1b8] sm:$0xff]
    %v1685 = vld [vmem:[#allocation2 + $0x1c0] sm:$0xff]
    %v1686 = vld [vmem:[#allocation2 + $0x1c8] sm:$0xff]
    %v1687 = vld [vmem:[#allocation2 + $0x1d0] sm:$0xff]
    %v1688 = vld [vmem:[#allocation2 + $0x1d8] sm:$0xff]
    %v1689 = vld [vmem:[#allocation2 + $0x1e0] sm:$0xff]
    %v1690 = vld [vmem:[#allocation2 + $0x1e8] sm:$0xff]
    %v1691 = vld [vmem:[#allocation2 + $0x1f0] sm:$0xff]
    %v1692 = vld [vmem:[#allocation2 + $0x1f8] sm:$0xff]
    %v1693 = vld [vmem:[#allocation2 + $0x200] sm:$0xff]
    %v1694 = vld [vmem:[#allocation2 + $0x208] sm:$0xff]
    %v1695 = vld [vmem:[#allocation2 + $0x210] sm:$0xff]
    %v1696 = vld [vmem:[#allocation2 + $0x218] sm:$0xff]
    %v1697 = vld [vmem:[#allocation2 + $0x220] sm:$0xff]
    %v1698 = vld [vmem:[#allocation2 + $0x228] sm:$0xff]
    %v1699 = vld [vmem:[#allocation2 + $0x230] sm:$0xff]
    %v1700 = vld [vmem:[#allocation2 + $0x238] sm:$0xff]
    %v1701 = vld [vmem:[#allocation2 + $0x240] sm:$0xff]
    %v1702 = vld [vmem:[#allocation2 + $0x248] sm:$0xff]
    %v1703 = vld [vmem:[#allocation2 + $0x250] sm:$0xff]
    %v1704 = vld [vmem:[#allocation2 + $0x258] sm:$0xff]
    %v1705 = vld [vmem:[#allocation2 + $0x260] sm:$0xff]
    %v1706 = vld [vmem:[#allocation2 + $0x268] sm:$0xff]
    %v1707 = vld [vmem:[#allocation2 + $0x270] sm:$0xff]
    %v1708 = vld [vmem:[#allocation2 + $0x278] sm:$0xff]
    %v1709 = vld [vmem:[#allocation2 + $0x280] sm:$0xff]
    %v1710 = vld [vmem:[#allocation2 + $0x288] sm:$0xff]
    %v1711 = vld [vmem:[#allocation2 + $0x290] sm:$0xff]
    %v1712 = vld [vmem:[#allocation2 + $0x298] sm:$0xff]
    %v1713 = vld [vmem:[#allocation2 + $0x2a0] sm:$0xff]
    %v1714 = vld [vmem:[#allocation2 + $0x2a8] sm:$0xff]
    %v1715 = vld [vmem:[#allocation2 + $0x2b0] sm:$0xff]
    %v1716 = vld [vmem:[#allocation2 + $0x2b8] sm:$0xff]
    %v1717 = vld [vmem:[#allocation2 + $0x2c0] sm:$0xff]
    %v1718 = vld [vmem:[#allocation2 + $0x2c8] sm:$0xff]
    %v1719 = vld [vmem:[#allocation2 + $0x2d0] sm:$0xff]
    %v1720 = vld [vmem:[#allocation2 + $0x2d8] sm:$0xff]
    %v1721 = vld [vmem:[#allocation2 + $0x2e0] sm:$0xff]
    %v1722 = vld [vmem:[#allocation2 + $0x2e8] sm:$0xff]
    %v1723 = vld [vmem:[#allocation2 + $0x2f0] sm:$0xff]
    %v1724 = vld [vmem:[#allocation2 + $0x2f8] sm:$0xff]
    %v1725 = vld [vmem:[#allocation2 + $0x300] sm:$0xff]
    %v1726 = vld [vmem:[#allocation2 + $0x308] sm:$0xff]
    %v1727 = vld [vmem:[#allocation2 + $0x310] sm:$0xff]
    %v1728 = vld [vmem:[#allocation2 + $0x318] sm:$0xff]
    %v1729 = vld [vmem:[#allocation2 + $0x320] sm:$0xff]
    %v1730 = vld [vmem:[#allocation2 + $0x328] sm:$0xff]
    %v1731 = vld [vmem:[#allocation2 + $0x330] sm:$0xff]
    %v1732 = vld [vmem:[#allocation2 + $0x338] sm:$0xff]
    %v1733 = vld [vmem:[#allocation2 + $0x340] sm:$0xff]
    %v1734 = vld [vmem:[#allocation2 + $0x348] sm:$0xff]
    %v1735 = vld [vmem:[#allocation2 + $0x350] sm:$0xff]
    %v1736 = vld [vmem:[#allocation2 + $0x358] sm:$0xff]
    %v1737 = vld [vmem:[#allocation2 + $0x360] sm:$0xff]
    %v1738 = vld [vmem:[#allocation2 + $0x368] sm:$0xff]
    %v1739 = vld [vmem:[#allocation2 + $0x370] sm:$0xff]
    %v1740 = vld [vmem:[#allocation2 + $0x378] sm:$0xff]
    %v1741 = vld [vmem:[#allocation2 + $0x380] sm:$0xff]
    %v1742 = vld [vmem:[#allocation2 + $0x388] sm:$0xff]
    %v1743 = vld [vmem:[#allocation2 + $0x390] sm:$0xff]
    %v1744 = vld [vmem:[#allocation2 + $0x398] sm:$0xff]
    %v1745 = vld [vmem:[#allocation2 + $0x3a0] sm:$0xff]
    %v1746 = vld [vmem:[#allocation2 + $0x3a8] sm:$0xff]
    %v1747 = vld [vmem:[#allocation2 + $0x3b0] sm:$0xff]
    %v1748 = vld [vmem:[#allocation2 + $0x3b8] sm:$0xff]
    %v1749 = vld [vmem:[#allocation2 + $0x3c0] sm:$0xff]
    %v1750 = vld [vmem:[#allocation2 + $0x3c8] sm:$0xff]
    %v1751 = vld [vmem:[#allocation2 + $0x3d0] sm:$0xff]
    %v1752 = vld [vmem:[#allocation2 + $0x3d8] sm:$0xff]
    %v1753 = vld [vmem:[#allocation2 + $0x3e0] sm:$0xff]
    %v1754 = vld [vmem:[#allocation2 + $0x3e8] sm:$0xff]
    %v1755 = vld [vmem:[#allocation2 + $0x3f0] sm:$0xff]
    %v1756 = vld [vmem:[#allocation2 + $0x3f8] sm:$0xff]
    %v1757 = vld [vmem:[#allocation2 + $0x400] sm:$0xff]
    %v1758 = vld [vmem:[#allocation2 + $0x408] sm:$0xff]
    %v1759 = vld [vmem:[#allocation2 + $0x410] sm:$0xff]
    %v1760 = vld [vmem:[#allocation2 + $0x418] sm:$0xff]
    %v1761 = vld [vmem:[#allocation2 + $0x420] sm:$0xff]
    %v1762 = vld [vmem:[#allocation2 + $0x428] sm:$0xff]
    %v1763 = vld [vmem:[#allocation2 + $0x430] sm:$0xff]
    %v1764 = vld [vmem:[#allocation2 + $0x438] sm:$0xff]
    %v1765 = vld [vmem:[#allocation2 + $0x440] sm:$0xff]
    %v1766 = vld [vmem:[#allocation2 + $0x448] sm:$0xff]
    %v1767 = vld [vmem:[#allocation2 + $0x450] sm:$0xff]
    %v1768 = vld [vmem:[#allocation2 + $0x458] sm:$0xff]
    %v1769 = vld [vmem:[#allocation2 + $0x460] sm:$0xff]
    %v1770 = vld [vmem:[#allocation2 + $0x468] sm:$0xff]
    %v1771 = vld [vmem:[#allocation2 + $0x470] sm:$0xff]
    %v1772 = vld [vmem:[#allocation2 + $0x478] sm:$0xff]
    %v1773 = vld [vmem:[#allocation2 + $0x480] sm:$0xff]
    %v1774 = vld [vmem:[#allocation2 + $0x488] sm:$0xff]
    %v1775 = vld [vmem:[#allocation2 + $0x490] sm:$0xff]
    %v1776 = vld [vmem:[#allocation2 + $0x498] sm:$0xff]
    %v1777 = vld [vmem:[#allocation2 + $0x4a0] sm:$0xff]
    %v1778 = vld [vmem:[#allocation2 + $0x4a8] sm:$0xff]
    %v1779 = vld [vmem:[#allocation2 + $0x4b0] sm:$0xff]
    %v1780 = vld [vmem:[#allocation2 + $0x4b8] sm:$0xff]
    %v1781 = vld [vmem:[#allocation2 + $0x4c0] sm:$0xff]
    %v1782 = vld [vmem:[#allocation2 + $0x4c8] sm:$0xff]
    %v1783 = vld [vmem:[#allocation2 + $0x4d0] sm:$0xff]
    %v1784 = vld [vmem:[#allocation2 + $0x4d8] sm:$0xff]
    %v1785 = vld [vmem:[#allocation2 + $0x4e0] sm:$0xff]
    %v1786 = vld [vmem:[#allocation2 + $0x4e8] sm:$0xff]
    %v1787 = vld [vmem:[#allocation2 + $0x4f0] sm:$0xff]
    %v1788 = vld [vmem:[#allocation2 + $0x4f8] sm:$0xff]
    %v1789 = vld [vmem:[#allocation2 + $0x500] sm:$0xff]
    %v1790 = vld [vmem:[#allocation2 + $0x508] sm:$0xff]
    %v1791 = vld [vmem:[#allocation2 + $0x510] sm:$0xff]
    %v1792 = vld [vmem:[#allocation2 + $0x518] sm:$0xff]
    %v1793 = vld [vmem:[#allocation2 + $0x520] sm:$0xff]
    %v1794 = vld [vmem:[#allocation2 + $0x528] sm:$0xff]
    %v1795 = vld [vmem:[#allocation2 + $0x530] sm:$0xff]
    %v1796 = vld [vmem:[#allocation2 + $0x538] sm:$0xff]
    %v1797 = vld [vmem:[#allocation2 + $0x540] sm:$0xff]
    %v1798 = vld [vmem:[#allocation2 + $0x548] sm:$0xff]
    %v1799 = vld [vmem:[#allocation2 + $0x550] sm:$0xff]
    %v1800 = vld [vmem:[#allocation2 + $0x558] sm:$0xff]
    %v1801 = vld [vmem:[#allocation2 + $0x560] sm:$0xff]
    %v1802 = vld [vmem:[#allocation2 + $0x568] sm:$0xff]
    %v1803 = vld [vmem:[#allocation2 + $0x570] sm:$0xff]
    %v1804 = vld [vmem:[#allocation2 + $0x578] sm:$0xff]
    %v1805 = vld [vmem:[#allocation2 + $0x580] sm:$0xff]
    %v1806 = vld [vmem:[#allocation2 + $0x588] sm:$0xff]
    %v1807 = vld [vmem:[#allocation2 + $0x590] sm:$0xff]
    %v1808 = vld [vmem:[#allocation2 + $0x598] sm:$0xff]
    %v1809 = vld [vmem:[#allocation2 + $0x5a0] sm:$0xff]
    %v1810 = vld [vmem:[#allocation2 + $0x5a8] sm:$0xff]
    %v1811 = vld [vmem:[#allocation2 + $0x5b0] sm:$0xff]
    %v1812 = vld [vmem:[#allocation2 + $0x5b8] sm:$0xff]
    %v1813 = vld [vmem:[#allocation2 + $0x5c0] sm:$0xff]
    %v1814 = vld [vmem:[#allocation2 + $0x5c8] sm:$0xff]
    %v1815 = vld [vmem:[#allocation2 + $0x5d0] sm:$0xff]
    %v1816 = vld [vmem:[#allocation2 + $0x5d8] sm:$0xff]
    %v1817 = vld [vmem:[#allocation2 + $0x5e0] sm:$0xff]
    %v1818 = vld [vmem:[#allocation2 + $0x5e8] sm:$0xff]
    %v1819 = vld [vmem:[#allocation2 + $0x5f0] sm:$0xff]
    %v1820 = vld [vmem:[#allocation2 + $0x5f8] sm:$0xff]
    %v1821 = vld [vmem:[#allocation2 + $0x600] sm:$0xff]
    %v1822 = vld [vmem:[#allocation2 + $0x608] sm:$0xff]
    %v1823 = vld [vmem:[#allocation2 + $0x610] sm:$0xff]
    %v1824 = vld [vmem:[#allocation2 + $0x618] sm:$0xff]
    %v1825 = vld [vmem:[#allocation2 + $0x620] sm:$0xff]
    %v1826 = vld [vmem:[#allocation2 + $0x628] sm:$0xff]
    %v1827 = vld [vmem:[#allocation2 + $0x630] sm:$0xff]
    %v1828 = vld [vmem:[#allocation2 + $0x638] sm:$0xff]
    %vm1829 = vcmask 130048
    %v1831 = vsel %vm1829, %v1624, 0
    %v1834 = vsel %vm1829, %v1628, 0
    %1836 = vmatprep.subr.mxu0 %v1630
    %1837 = vmatpush1.msra.mxu0 %v1629
    %1838 = vmatprep.subr.mxu0 %v1634
    %1839 = vmatpush1.msra.mxu0 %v1633
    %1840 = vmatprep.subr.mxu0 %v1638
    %1841 = vmatpush1.msra.mxu0 %v1637
    %1842 = vmatprep.subr.mxu0 %v1642
    %1843 = vmatpush1.msra.mxu0 %v1641
    %1844 = vmatprep.subr.mxu0 %v1646
    %1845 = vmatpush1.msra.mxu0 %v1645
    %1846 = vmatprep.subr.mxu0 %v1650
    %1847 = vmatpush1.msra.mxu0 %v1649
    %1848 = vmatprep.subr.mxu0 %v1654
    %1849 = vmatpush1.msra.mxu0 %v1653
    %1850 = vmatprep.subr.mxu0 %v1658
    %1851 = vmatpush1.msra.mxu0 %v1657
    %1852 = vmatprep.subr.mxu0 %v1662
    %1853 = vmatpush1.msra.mxu0 %v1661
    %1854 = vmatprep.subr.mxu0 %v1666
    %1855 = vmatpush1.msra.mxu0 %v1665
    %1856 = vmatprep.subr.mxu0 %v1670
    %1857 = vmatpush1.msra.mxu0 %v1669
    %1858 = vmatprep.subr.mxu0 %v1674
    %1859 = vmatpush1.msra.mxu0 %v1673
    %1860 = vmatprep.subr.mxu0 %v1678
    %1861 = vmatpush1.msra.mxu0 %v1677
    %1862 = vmatprep.subr.mxu0 %v1682
    %1863 = vmatpush1.msra.mxu0 %v1681
    %1864 = vmatprep.subr.mxu0 %v1686
    %1865 = vmatpush1.msra.mxu0 %v1685
    %1866 = vmatprep.subr.mxu0 %v1690
    %1867 = vmatpush1.msra.mxu0 %v1689
    %1868 = vmatprep.subr.mxu0 %v1694
    %1869 = vmatpush1.msra.mxu0 %v1693
    %1870 = vmatprep.subr.mxu0 %v1698
    %1871 = vmatpush1.msra.mxu0 %v1697
    %1872 = vmatprep.subr.mxu0 %v1702
    %1873 = vmatpush1.msra.mxu0 %v1701
    %1874 = vmatprep.subr.mxu0 %v1706
    %1875 = vmatpush1.msra.mxu0 %v1705
    %1876 = vmatprep.subr.mxu0 %v1710
    %1877 = vmatpush1.msra.mxu0 %v1709
    %1878 = vmatprep.subr.mxu0 %v1714
    %1879 = vmatpush1.msra.mxu0 %v1713
    %1880 = vmatprep.subr.mxu0 %v1718
    %1881 = vmatpush1.msra.mxu0 %v1717
    %1882 = vmatprep.subr.mxu0 %v1722
    %1883 = vmatpush1.msra.mxu0 %v1721
    %1884 = vmatprep.subr.mxu0 %v1726
    %1885 = vmatpush1.msra.mxu0 %v1725
    %1886 = vmatprep.subr.mxu0 %v1730
    %1887 = vmatpush1.msra.mxu0 %v1729
    %1888 = vmatprep.subr.mxu0 %v1734
    %1889 = vmatpush1.msra.mxu0 %v1733
    %1890 = vmatprep.subr.mxu0 %v1738
    %1891 = vmatpush1.msra.mxu0 %v1737
    %1892 = vmatprep.subr.mxu0 %v1742
    %1893 = vmatpush1.msra.mxu0 %v1741
    %1894 = vmatprep.subr.mxu0 %v1746
    %1895 = vmatpush1.msra.mxu0 %v1745
    %1896 = vmatprep.subr.mxu0 %v1750
    %1897 = vmatpush1.msra.mxu0 %v1749
    %1898 = vmatprep.subr.mxu0 %v1754
    %1899 = vmatpush1.msra.mxu0 %v1753
    %1900 = vmatprep.mubr.f32.mxu0 %v1622
    %1901 = vmatmul.mubr.f32.gmra.mrb[0].mxu0 %v1621
    %v1902 = vpop.f32.mrb[0].mxu0
    %v1903 = vadd.f32 0.0, %v1902
    %v1904 = vpop.f32.mrb[0].mxu0
    %v1905 = vadd.f32 0.0, %v1904
    %1906 = vmatprep.mubr.f32.mxu0 %v1626
    %1907 = vmatmul.mubr.f32.gmra.mrb[0].mxu0 %v1625
    %v1908 = vpop.f32.mrb[0].mxu0
    %v1909 = vadd.f32 0.0, %v1908
    %v1910 = vpop.f32.mrb[0].mxu0
    %v1911 = vadd.f32 0.0, %v1910
    %1912 = vdwg.mxu0
    %1913 = vmatprep.subr.mxu0 %v1758
    %1914 = vmatpush1.msra.mxu0 %v1757
    %1915 = vmatprep.subr.mxu0 %v1762
    %1916 = vmatpush1.msra.mxu0 %v1761
    %1917 = vmatprep.subr.mxu0 %v1766
    %1918 = vmatpush1.msra.mxu0 %v1765
    %1919 = vmatprep.subr.mxu0 %v1770
    %1920 = vmatpush1.msra.mxu0 %v1769
    %1921 = vmatprep.subr.mxu0 %v1774
    %1922 = vmatpush1.msra.mxu0 %v1773
    %1923 = vmatprep.subr.mxu0 %v1778
    %1924 = vmatpush1.msra.mxu0 %v1777
    %1925 = vmatprep.subr.mxu0 %v1782
    %1926 = vmatpush1.msra.mxu0 %v1781
    %1927 = vmatprep.subr.mxu0 %v1786
    %1928 = vmatpush1.msra.mxu0 %v1785
    %1929 = vmatprep.subr.mxu0 %v1790
    %1930 = vmatpush1.msra.mxu0 %v1789
    %1931 = vmatprep.subr.mxu0 %v1794
    %1932 = vmatpush1.msra.mxu0 %v1793
    %1933 = vmatprep.subr.mxu0 %v1798
    %1934 = vmatpush1.msra.mxu0 %v1797
    %1935 = vmatprep.subr.mxu0 %v1802
    %1936 = vmatpush1.msra.mxu0 %v1801
    %1937 = vmatprep.subr.mxu0 %v1806
    %1938 = vmatpush1.msra.mxu0 %v1805
    %1939 = vmatprep.subr.mxu0 %v1810
    %1940 = vmatpush1.msra.mxu0 %v1809
    %1941 = vmatprep.subr.mxu0 %v1814
    %1942 = vmatpush1.msra.mxu0 %v1813
    %1943 = vmatprep.subr.mxu0 %v1818
    %1944 = vmatpush1.msra.mxu0 %v1817
    %1945 = vmatprep.subr.mxu0 %v1822
    %1946 = vmatpush1.msra.mxu0 %v1821
    %1947 = vmatprep.subr.mxu0 %v1826
    %1948 = vmatpush1.msra.mxu0 %v1825
    %1949 = vmatprep.subr.mxu0 0.0
    %1950 = vmatpush1.msra.mxu0 0.0
    %1951 = vmatprep.subr.mxu0 0.0
    %1952 = vmatpush1.msra.mxu0 0.0
    %1953 = vmatprep.subr.mxu0 0.0
    %1954 = vmatpush1.msra.mxu0 0.0
    %1955 = vmatprep.subr.mxu0 0.0
    %1956 = vmatpush1.msra.mxu0 0.0
    %1957 = vmatprep.subr.mxu0 0.0
    %1958 = vmatpush1.msra.mxu0 0.0
    %1959 = vmatprep.subr.mxu0 0.0
    %1960 = vmatpush1.msra.mxu0 0.0
    %1961 = vmatprep.subr.mxu0 0.0
    %1962 = vmatpush1.msra.mxu0 0.0
    %1963 = vmatprep.subr.mxu0 0.0
    %1964 = vmatpush1.msra.mxu0 0.0
    %1965 = vmatprep.subr.mxu0 0.0
    %1966 = vmatpush1.msra.mxu0 0.0
    %1967 = vmatprep.subr.mxu0 0.0
    %1968 = vmatpush1.msra.mxu0 0.0
    %1969 = vmatprep.subr.mxu0 0.0
    %1970 = vmatpush1.msra.mxu0 0.0
    %1971 = vmatprep.subr.mxu0 0.0
    %1972 = vmatpush1.msra.mxu0 0.0
    %1973 = vmatprep.subr.mxu0 0.0
    %1974 = vmatpush1.msra.mxu0 0.0
    %1975 = vmatprep.subr.mxu0 0.0
    %1976 = vmatpush1.msra.mxu0 0.0
    %1977 = vmatprep.mubr.f32.mxu0 %v1831
    %1978 = vmatmul.mubr.f32.gmra.mrb[0].mxu0 %v1623
    %v1979 = vpop.f32.mrb[0].mxu0
    %v1980 = vadd.f32 %v1903, %v1979
    %v1981 = vpop.f32.mrb[0].mxu0
    %v1982 = vadd.f32 %v1905, %v1981
    %1983 = vmatprep.mubr.f32.mxu0 %v1834
    %1984 = vmatmul.mubr.f32.gmra.mrb[0].mxu0 %v1627
    %v1985 = vpop.f32.mrb[0].mxu0
    %v1986 = vadd.f32 %v1909, %v1985
    %v1987 = vpop.f32.mrb[0].mxu0
    %v1988 = vadd.f32 %v1911, %v1987
    %1989 = vdwg.mxu0
    %1990 = vmatprep.subr.mxu0 %v1632
    %1991 = vmatpush1.msra.mxu0 %v1631
    %1992 = vmatprep.subr.mxu0 %v1636
    %1993 = vmatpush1.msra.mxu0 %v1635
    %1994 = vmatprep.subr.mxu0 %v1640
    %1995 = vmatpush1.msra.mxu0 %v1639
    %1996 = vmatprep.subr.mxu0 %v1644
    %1997 = vmatpush1.msra.mxu0 %v1643
    %1998 = vmatprep.subr.mxu0 %v1648
    %1999 = vmatpush1.msra.mxu0 %v1647
    %2000 = vmatprep.subr.mxu0 %v1652
    %2001 = vmatpush1.msra.mxu0 %v1651
    %2002 = vmatprep.subr.mxu0 %v1656
    %2003 = vmatpush1.msra.mxu0 %v1655
    %2004 = vmatprep.subr.mxu0 %v1660
    %2005 = vmatpush1.msra.mxu0 %v1659
    %2006 = vmatprep.subr.mxu0 %v1664
    %2007 = vmatpush1.msra.mxu0 %v1663
    %2008 = vmatprep.subr.mxu0 %v1668
    %2009 = vmatpush1.msra.mxu0 %v1667
    %2010 = vmatprep.subr.mxu0 %v1672
    %2011 = vmatpush1.msra.mxu0 %v1671
    %2012 = vmatprep.subr.mxu0 %v1676
    %2013 = vmatpush1.msra.mxu0 %v1675
    %2014 = vmatprep.subr.mxu0 %v1680
    %2015 = vmatpush1.msra.mxu0 %v1679
    %2016 = vmatprep.subr.mxu0 %v1684
    %2017 = vmatpush1.msra.mxu0 %v1683
    %2018 = vmatprep.subr.mxu0 %v1688
    %2019 = vmatpush1.msra.mxu0 %v1687
    %2020 = vmatprep.subr.mxu0 %v1692
    %2021 = vmatpush1.msra.mxu0 %v1691
    %2022 = vmatprep.subr.mxu0 %v1696
    %2023 = vmatpush1.msra.mxu0 %v1695
    %2024 = vmatprep.subr.mxu0 %v1700
    %2025 = vmatpush1.msra.mxu0 %v1699
    %2026 = vmatprep.subr.mxu0 %v1704
    %2027 = vmatpush1.msra.mxu0 %v1703
    %2028 = vmatprep.subr.mxu0 %v1708
    %2029 = vmatpush1.msra.mxu0 %v1707
    %2030 = vmatprep.subr.mxu0 %v1712
    %2031 = vmatpush1.msra.mxu0 %v1711
    %2032 = vmatprep.subr.mxu0 %v1716
    %2033 = vmatpush1.msra.mxu0 %v1715
    %2034 = vmatprep.subr.mxu0 %v1720
    %2035 = vmatpush1.msra.mxu0 %v1719
    %2036 = vmatprep.subr.mxu0 %v1724
    %2037 = vmatpush1.msra.mxu0 %v1723
    %2038 = vmatprep.subr.mxu0 %v1728
    %2039 = vmatpush1.msra.mxu0 %v1727
    %2040 = vmatprep.subr.mxu0 %v1732
    %2041 = vmatpush1.msra.mxu0 %v1731
    %2042 = vmatprep.subr.mxu0 %v1736
    %2043 = vmatpush1.msra.mxu0 %v1735
    %2044 = vmatprep.subr.mxu0 %v1740
    %2045 = vmatpush1.msra.mxu0 %v1739
    %2046 = vmatprep.subr.mxu0 %v1744
    %2047 = vmatpush1.msra.mxu0 %v1743
    %2048 = vmatprep.subr.mxu0 %v1748
    %2049 = vmatpush1.msra.mxu0 %v1747
    %2050 = vmatprep.subr.mxu0 %v1752
    %2051 = vmatpush1.msra.mxu0 %v1751
    %2052 = vmatprep.subr.mxu0 %v1756
    %2053 = vmatpush1.msra.mxu0 %v1755
    %2054 = vmatprep.mubr.f32.mxu0 %v1622
    %2055 = vmatmul.mubr.f32.gmra.mrb[0].mxu0 %v1621
    %v2056 = vpop.f32.mrb[0].mxu0
    %v2057 = vadd.f32 0.0, %v2056
    %v2058 = vpop.f32.mrb[0].mxu0
    %v2059 = vadd.f32 0.0, %v2058
    %2060 = vmatprep.mubr.f32.mxu0 %v1626
    %2061 = vmatmul.mubr.f32.gmra.mrb[0].mxu0 %v1625
    %v2062 = vpop.f32.mrb[0].mxu0
    %v2063 = vadd.f32 0.0, %v2062
    %v2064 = vpop.f32.mrb[0].mxu0
    %v2065 = vadd.f32 0.0, %v2064
    %2066 = vdwg.mxu0
    %2067 = vmatprep.subr.mxu0 %v1760
    %2068 = vmatpush1.msra.mxu0 %v1759
    %2069 = vmatprep.subr.mxu0 %v1764
    %2070 = vmatpush1.msra.mxu0 %v1763
    %2071 = vmatprep.subr.mxu0 %v1768
    %2072 = vmatpush1.msra.mxu0 %v1767
    %2073 = vmatprep.subr.mxu0 %v1772
    %2074 = vmatpush1.msra.mxu0 %v1771
    %2075 = vmatprep.subr.mxu0 %v1776
    %2076 = vmatpush1.msra.mxu0 %v1775
    %2077 = vmatprep.subr.mxu0 %v1780
    %2078 = vmatpush1.msra.mxu0 %v1779
    %2079 = vmatprep.subr.mxu0 %v1784
    %2080 = vmatpush1.msra.mxu0 %v1783
    %2081 = vmatprep.subr.mxu0 %v1788
    %2082 = vmatpush1.msra.mxu0 %v1787
    %2083 = vmatprep.subr.mxu0 %v1792
    %2084 = vmatpush1.msra.mxu0 %v1791
    %2085 = vmatprep.subr.mxu0 %v1796
    %2086 = vmatpush1.msra.mxu0 %v1795
    %2087 = vmatprep.subr.mxu0 %v1800
    %2088 = vmatpush1.msra.mxu0 %v1799
    %2089 = vmatprep.subr.mxu0 %v1804
    %2090 = vmatpush1.msra.mxu0 %v1803
    %2091 = vmatprep.subr.mxu0 %v1808
    %2092 = vmatpush1.msra.mxu0 %v1807
    %2093 = vmatprep.subr.mxu0 %v1812
    %2094 = vmatpush1.msra.mxu0 %v1811
    %2095 = vmatprep.subr.mxu0 %v1816
    %2096 = vmatpush1.msra.mxu0 %v1815
    %2097 = vmatprep.subr.mxu0 %v1820
    %2098 = vmatpush1.msra.mxu0 %v1819
    %2099 = vmatprep.subr.mxu0 %v1824
    %2100 = vmatpush1.msra.mxu0 %v1823
    %2101 = vmatprep.subr.mxu0 %v1828
    %2102 = vmatpush1.msra.mxu0 %v1827
    %2103 = vmatprep.subr.mxu0 0.0
    %2104 = vmatpush1.msra.mxu0 0.0
    %2105 = vmatprep.subr.mxu0 0.0
    %2106 = vmatpush1.msra.mxu0 0.0
    %2107 = vmatprep.subr.mxu0 0.0
    %2108 = vmatpush1.msra.mxu0 0.0
    %2109 = vmatprep.subr.mxu0 0.0
    %2110 = vmatpush1.msra.mxu0 0.0
    %2111 = vmatprep.subr.mxu0 0.0
    %2112 = vmatpush1.msra.mxu0 0.0
    %2113 = vmatprep.subr.mxu0 0.0
    %2114 = vmatpush1.msra.mxu0 0.0
    %2115 = vmatprep.subr.mxu0 0.0
    %2116 = vmatpush1.msra.mxu0 0.0
    %2117 = vmatprep.subr.mxu0 0.0
    %2118 = vmatpush1.msra.mxu0 0.0
    %2119 = vmatprep.subr.mxu0 0.0
    %2120 = vmatpush1.msra.mxu0 0.0
    %2121 = vmatprep.subr.mxu0 0.0
    %2122 = vmatpush1.msra.mxu0 0.0
    %2123 = vmatprep.subr.mxu0 0.0
    %2124 = vmatpush1.msra.mxu0 0.0
    %2125 = vmatprep.subr.mxu0 0.0
    %2126 = vmatpush1.msra.mxu0 0.0
    %2127 = vmatprep.subr.mxu0 0.0
    %2128 = vmatpush1.msra.mxu0 0.0
    %2129 = vmatprep.subr.mxu0 0.0
    %2130 = vmatpush1.msra.mxu0 0.0
    %2131 = vmatprep.mubr.f32.mxu0 %v1831
    %2132 = vmatmul.mubr.f32.gmra.mrb[0].mxu0 %v1623
    %v2133 = vpop.f32.mrb[0].mxu0
    %v2134 = vadd.f32 %v2057, %v2133
    %v2135 = vpop.f32.mrb[0].mxu0
    %v2136 = vadd.f32 %v2059, %v2135
    %2137 = vmatprep.mubr.f32.mxu0 %v1834
    %2138 = vmatmul.mubr.f32.gmra.mrb[0].mxu0 %v1627
    %v2139 = vpop.f32.mrb[0].mxu0
    %v2140 = vadd.f32 %v2063, %v2139
    %v2141 = vpop.f32.mrb[0].mxu0
    %v2142 = vadd.f32 %v2065, %v2141
    %2143 = vdwg.mxu0
    %v2144 = vadd.f32 %v1980, %v1982
    %v2145 = vadd.f32 %v2144, %v2134
    %v2146 = vadd.f32 %v2145, %v2136
    %2147 = vadd.xlane.f32.xlu0 %v2146
    %v2148 = vpop.xlane.xlu0 %2147
    %v2149 = vadd.f32 %v1986, %v1988
    %v2150 = vadd.f32 %v2149, %v2140
    %v2151 = vadd.f32 %v2150, %v2142
    %2152 = vadd.xlane.f32.xlu0 %v2151
    %v2153 = vpop.xlane.xlu0 %2152
    %v2154 = vmul.f32 %v2148, 0.001953125
    %v2155 = vmul.f32 %v2153, 0.001953125
    %v2156 = vsub.f32 %v1980, %v2154
    %v2157 = vsub.f32 %v1982, %v2154
    %v2158 = vsub.f32 %v2134, %v2154
    %v2159 = vsub.f32 %v2136, %v2154
    %v2160 = vsub.f32 %v1986, %v2155
    %v2161 = vsub.f32 %v1988, %v2155
    %v2162 = vsub.f32 %v2140, %v2155
    %v2163 = vsub.f32 %v2142, %v2155
    %v2164 = vmul.f32 %v2156, %v2156
    %v2165 = vmul.f32 %v2157, %v2157
    %v2166 = vmul.f32 %v2158, %v2158
    %v2167 = vmul.f32 %v2159, %v2159
    %v2168 = vmul.f32 %v2160, %v2160
    %v2169 = vmul.f32 %v2161, %v2161
    %v2170 = vmul.f32 %v2162, %v2162
    %v2171 = vmul.f32 %v2163, %v2163
    %v2172 = vadd.f32 %v2164, %v2165
    %v2173 = vadd.f32 %v2172, %v2166
    %v2174 = vadd.f32 %v2173, %v2167
    %2175 = vadd.xlane.f32.xlu0 %v2174
    %v2176 = vpop.xlane.xlu0 %2175
    %v2177 = vadd.f32 %v2168, %v2169
    %v2178 = vadd.f32 %v2177, %v2170
    %v2179 = vadd.f32 %v2178, %v2171
    %2180 = vadd.xlane.f32.xlu0 %v2179
    %v2181 = vpop.xlane.xlu0 %2180
    %v2182 = vmul.f32 %v2176, 0.001953125
    %v2183 = vmul.f32 %v2181, 0.001953125
    %v2184 = vadd.f32 %v2182, 1e-05
    %v2185 = vadd.f32 %v2183, 1e-05
    %v2186 = vrsqrt.pop %v2184
    %v2187 = vrsqrt.pop %v2185
    %v2188 = vmul.f32 %v2156, %v2186
    %v2189 = vmul.f32 %v2157, %v2186
    %v2190 = vmul.f32 %v2158, %v2186
    %v2191 = vmul.f32 %v2159, %v2186
    %v2192 = vmul.f32 %v2160, %v2187
    %v2193 = vmul.f32 %v2161, %v2187
    %v2194 = vmul.f32 %v2162, %v2187
    %v2195 = vmul.f32 %v2163, %v2187
    %s2196 = smul.u32 %s29, 16
    %s2197 = scalar_lea.vmem %s3, %s2196
    %v2198 = vld [vmem:[%s2197] sm:$0xff]
    %v2199 = vld [vmem:[%s2197 + $0x8] sm:$0xff]
    %2201 = vset.pattern.permute.xlu0 0
    %2202 = vperm.xlu0 %2201, %v2198
    %v2203 = vpop.permute.xlu0 %2202
    %2206 = vset.pattern.permute.xlu0 0
    %2207 = vperm.xlu0 %2206, %v2199
    %v2208 = vpop.permute.xlu0 %2207
    %v2210 = vmul.f32 %v2188, %v2203
    %v2211 = vmul.f32 %v2189, %v2203
    %v2212 = vmul.f32 %v2190, %v2203
    %v2213 = vmul.f32 %v2191, %v2203
    %v2214 = vmul.f32 %v2192, %v2208
    %v2215 = vmul.f32 %v2193, %v2208
    %v2216 = vmul.f32 %v2194, %v2208
    %v2217 = vmul.f32 %v2195, %v2208
    %s2218 = scalar_lea.vmem %s4, %s2196
    %v2219 = vld [vmem:[%s2218] sm:$0xff]
    %v2220 = vld [vmem:[%s2218 + $0x8] sm:$0xff]
    %2222 = vset.pattern.permute.xlu0 0
    %2223 = vperm.xlu0 %2222, %v2219
    %v2224 = vpop.permute.xlu0 %2223
    %2227 = vset.pattern.permute.xlu0 0
    %2228 = vperm.xlu0 %2227, %v2220
    %v2229 = vpop.permute.xlu0 %2228
    %v2231 = vadd.f32 %v2210, %v2224
    %v2232 = vadd.f32 %v2211, %v2224
    %v2233 = vadd.f32 %v2212, %v2224
    %v2234 = vadd.f32 %v2213, %v2224
    %v2235 = vadd.f32 %v2214, %v2229
    %v2236 = vadd.f32 %v2215, %v2229
    %v2237 = vadd.f32 %v2216, %v2229
    %v2238 = vadd.f32 %v2217, %v2229
    %v2239 = vmax.f32 %v2231, 0.0
    %v2240 = vmax.f32 %v2232, 0.0
    %v2241 = vmax.f32 %v2233, 0.0
    %v2242 = vmax.f32 %v2234, 0.0
    %v2243 = vmax.f32 %v2235, 0.0
    %v2244 = vmax.f32 %v2236, 0.0
    %v2245 = vmax.f32 %v2237, 0.0
    %v2246 = vmax.f32 %v2238, 0.0
  $region26: #{_lambda_.1} parent=0 // loop_footer
    %s33 = sadd.s32 1, %s29
  $region27: #{_lambda_.1} parent=0 // loop_footer_branch
    %28 = sbr.rel target = $region23
  $region28: #{_lambda_.1} parent=0 // loop_exit
    _
  %2247 = vst [vmem:[%s5] sm:$0xff] %v34
  %2248 = vst [vmem:[%s5 + $0x8] sm:$0xff] %v35
  %2249 = vst [vmem:[%s5 + $0x10] sm:$0xff] %v36
  %2250 = vst [vmem:[%s5 + $0x18] sm:$0xff] %v37
  %2251 = vst [vmem:[%s5 + $0x20] sm:$0xff] %v38
  %2252 = vst [vmem:[%s5 + $0x28] sm:$0xff] %v39
  %2253 = vst [vmem:[%s5 + $0x30] sm:$0xff] %v40
  %2254 = vst [vmem:[%s5 + $0x38] sm:$0xff] %v41
  // Predicated region
  $region29: #{_lambda_.1} parent=0 // pred_check
    _
  $region30: #{_lambda_.1} parent=0 // pred_check_branch
    %2256 = sbr.rel (0) target = $region32
  $region31: #{_lambda_.1} parent=0 // pred_region
    _
  $region32: #{_lambda_.1} parent=0 // pred_fallthru
    _
  // Predicated region
  $region33: #{_lambda_.1} parent=0 // pred_check
    _
  $region34: #{_lambda_.1} parent=0 // pred_check_branch
    %2258 = sbr.rel (0) target = $region36
  $region35: #{_lambda_.1} parent=0 // pred_region
    _
  $region36: #{_lambda_.1} parent=0 // pred_fallthru
    _

</llo_original>
